<compile_context>
chip_gen: v7x
topology: tpu7x:2x2x1
jax: 0.10.0
libtpu: 0.0.40
codegen_flags: <defaults>
</compile_context>

<pallas_src>
import functools

import jax
import jax.numpy as jnp
from jax import lax
from jax.experimental import pallas as pl
from jax.experimental.pallas import tpu as pltpu

EPS = 1e-5
LANE = 128
VMEM_LIMIT = 32 * 1024 * 1024  # explicit; also safe headroom for v7x's 64 MiB VMEM


def _conv_bn_relu_kernel(p_ref, w_ref, g_ref, b_ref, o_ref, sum_sc, sq_sc, *,
                         hw, img_w, out_ch, o_pad, count):
    """Fused 3x3 conv + train-mode BatchNorm + ReLU.

    Grid = (phase, batch):
      phase 0: conv matmuls + per-channel sum / sum-of-squares into VMEM scratch.
      phase 1: conv matmuls again, normalize + affine + ReLU, emit NCHW-flat tile.
    """
    phase = pl.program_id(0)
    n = pl.program_id(1)

    @pl.when((phase == 0) & (n == 0))
    def _():
        sum_sc[...] = jnp.zeros_like(sum_sc)
        sq_sc[...] = jnp.zeros_like(sq_sc)

    # 3x3 conv as 3 accumulating (HW, 3C) @ (3C, OP) matmuls on the MXU
    # (bf16 operands, f32 accumulate).  The kj (width) taps live in the 3C
    # feature dim; the ki (height) taps are contiguous, sublane-aligned row
    # shifts of the width-gathered tile (1-row halo at top and bottom).
    y = jnp.zeros((hw, o_pad), jnp.float32)
    for ki in range(3):
        y = y + jnp.dot(p_ref[0, ki * img_w:ki * img_w + hw, :], w_ref[ki],
                        preferred_element_type=jnp.float32)

    @pl.when(phase == 0)
    def _():
        # NOTE: single-pass E[x^2]-mean^2; var is clamped >= 0 in phase 1.
        sum_sc[...] += jnp.sum(y, axis=0, keepdims=True)
        sq_sc[...] += jnp.sum(y * y, axis=0, keepdims=True)

    @pl.when(phase == 1)
    def _():
        inv_count = 1.0 / count
        mean = sum_sc[...] * inv_count                      # (1, OP)
        var = jnp.maximum(sq_sc[...] * inv_count - mean * mean, 0.0)
        scale = g_ref[...] * lax.rsqrt(var + EPS)
        shift = b_ref[...] - mean * scale
        yn = jnp.maximum(y * scale + shift, 0.0)            # (HW, OP) f32
        # Emit NCHW-flat: transpose (XLU) + static slice to the real channels.
        # Output block last dim = HW (lane-dense); no padded-channel bytes hit HBM.
        o_ref[0] = yn.T[:out_ch, :].astype(o_ref.dtype)     # (O, HW)


@jax.jit
def conv_block(x_nchw, weight, gamma, beta):
    """Forward of ConvBlock. x_nchw: (N, C, H, W), weight: (O, C, 3, 3)."""
    N, C, H, W = x_nchw.shape
    O = weight.shape[0]
    HW = H * W
    K3 = 3 * C                                              # width-gathered feature dim
    OP = max(LANE, ((O + LANE - 1) // LANE) * LANE)         # lane-dense matmul width
    count = float(N * HW)                                   # BN count (all rows real)

    # ---- glue: NCHW -> NHWC, bf16 BEFORE any inflation, 'same' halo pad, ----
    # ---- width-only tap gather (3x, not 9x im2col), flatten rows.         ----
    x = jnp.transpose(x_nchw, (0, 2, 3, 1)).astype(jnp.bfloat16)   # (N, H, W, C)
    xp = jnp.pad(x, ((0, 0), (1, 1), (1, 1), (0, 0)))              # (N, H+2, W+2, C)
    pk = jnp.concatenate([xp[:, :, kj:kj + W, :] for kj in range(3)],
                         axis=-1)                                  # (N, H+2, W, 3C)
    pk = pk.reshape(N, (H + 2) * W, K3)                            # row m = h'*W + w

    # weight (O, C, 3, 3) -> (ki, kj*C + c, O), padded to OP lanes, bf16
    w3 = jnp.transpose(weight, (2, 3, 1, 0)).reshape(3, K3, O).astype(jnp.float32)
    w3 = jnp.pad(w3, ((0, 0), (0, 0), (0, OP - O))).astype(jnp.bfloat16)
    g2 = jnp.pad(gamma.reshape(1, O).astype(jnp.float32), ((0, 0), (0, OP - O)))
    b2 = jnp.pad(beta.reshape(1, O).astype(jnp.float32), ((0, 0), (0, OP - O)))

    # ---- fused kernel: grid (phase, batch); phase is the outer (slow) axis ----
    # Phase-0 steps write back an untouched (garbage) output tile which phase 1
    # fully overwrites; that's N*O*HW*4 bytes of waste (negligible) for not
    # streaming any conv intermediate through HBM.
    out = pl.pallas_call(
        functools.partial(_conv_bn_relu_kernel, hw=HW, img_w=W, out_ch=O,
                          o_pad=OP, count=count),
        out_shape=jax.ShapeDtypeStruct((N, O, HW), jnp.float32),
        grid_spec=pltpu.PrefetchScalarGridSpec(
            num_scalar_prefetch=0,
            grid=(2, N),
            in_specs=[
                pl.BlockSpec((1, (H + 2) * W, K3), lambda p, n: (n, 0, 0)),
                pl.BlockSpec((3, K3, OP), lambda p, n: (0, 0, 0)),   # resident weights
                pl.BlockSpec((1, OP), lambda p, n: (0, 0)),          # gamma
                pl.BlockSpec((1, OP), lambda p, n: (0, 0)),          # beta
            ],
            out_specs=pl.BlockSpec((1, O, HW), lambda p, n: (n, 0, 0)),
            scratch_shapes=[pltpu.VMEM((1, OP), jnp.float32),        # per-channel sum
                            pltpu.VMEM((1, OP), jnp.float32)],       # per-channel sumsq
        ),
        compiler_params=pltpu.CompilerParams(
            dimension_semantics=("arbitrary", "arbitrary"),   # stats carried across steps
            vmem_limit_bytes=VMEM_LIMIT),
    )(pk, w3, g2, b2)

    # glue: (N, O, H*W) is already NCHW-flat; reshape is contiguous (no HBM pass).
    return out.reshape(N, O, H, W)


def conv_block_reference(x_nchw, weight, gamma, beta):
    """Pure-JAX f32 reference matching PyTorch ConvBlock forward (train-mode BN)."""
    x = jnp.transpose(x_nchw, (0, 2, 3, 1)).astype(jnp.float32)
    w = jnp.transpose(weight, (2, 3, 1, 0)).astype(jnp.float32)       # HWIO
    y = lax.conv_general_dilated(
        x, w, window_strides=(1, 1), padding="SAME",
        dimension_numbers=("NHWC", "HWIO", "NHWC"))
    mean = jnp.mean(y, axis=(0, 1, 2), keepdims=True)
    var = jnp.mean((y - mean) ** 2, axis=(0, 1, 2), keepdims=True)    # biased
    yn = (y - mean) * lax.rsqrt(var + EPS) * gamma.reshape(1, 1, 1, -1) \
         + beta.reshape(1, 1, 1, -1)
    return jnp.transpose(jnp.maximum(yn, 0.0), (0, 3, 1, 2))


if __name__ == "__main__":
    key = jax.random.PRNGKey(0)
    k_x, k_w, k_g, k_b = jax.random.split(key, 4)

    N, C, H, W = 2, 4, 16, 16
    OUT_CH = 8

    x = jax.random.normal(k_x, (N, C, H, W), dtype=jnp.float32)
    # Conv2d(in_ch, out_ch, 3, padding='same', bias=False) weight
    weight = jax.random.normal(k_w, (OUT_CH, C, 3, 3), dtype=jnp.float32) * 0.1
    # BatchNorm2d affine params (randomized to exercise scale/shift path)
    gamma = 1.0 + 0.1 * jax.random.normal(k_g, (OUT_CH,), dtype=jnp.float32)
    beta = 0.1 * jax.random.normal(k_b, (OUT_CH,), dtype=jnp.float32)

    out = jax.block_until_ready(conv_block(x, weight, gamma, beta))
    ref = jax.block_until_ready(conv_block_reference(x, weight, gamma, beta))

    assert out.shape == (N, OUT_CH, H, W), out.shape
    # bf16 matmul operands (f32 accumulate) vs f32 reference -> ~1e-2 tolerance.
    max_err = float(jnp.max(jnp.abs(out - ref)))
    assert jnp.allclose(out, ref, rtol=2e-2, atol=2e-2), max_err
    print("KERNEL_OK")
</pallas_src>

<mosaic_0001>
module attributes {stable_mosaic.version = 11 : i64} {
  func.func @_conv_bn_relu_kernel(%arg0: i32, %arg1: i32, %arg2: memref<1x288x12xbf16, #tpu.memory_space<vmem>>, %arg3: memref<3x12x128xbf16, #tpu.memory_space<vmem>>, %arg4: memref<1x128xf32, #tpu.memory_space<vmem>>, %arg5: memref<1x128xf32, #tpu.memory_space<vmem>>, %arg6: memref<1x8x256xf32, #tpu.memory_space<vmem>>, %arg7: memref<1x128xf32, #tpu.memory_space<vmem>>, %arg8: memref<1x128xf32, #tpu.memory_space<vmem>>) attributes {dimension_semantics = [#tpu.dimension_semantics<arbitrary>, #tpu.dimension_semantics<arbitrary>], iteration_bounds = array<i64: 2, 2>, scalar_prefetch = 0 : i64, scratch_operands = 2 : i64, tpu.core_type = #tpu.core_type<tc>, window_params = [{transform_indices = @transform_0, window_bounds = array<i64: 1, 288, 12>}, {pipeline_mode = #tpu.pipeline_mode<synchronous>, transform_indices = @transform_1, window_bounds = array<i64: 3, 12, 128>}, {pipeline_mode = #tpu.pipeline_mode<synchronous>, transform_indices = @transform_2, window_bounds = array<i64: 1, 128>}, {pipeline_mode = #tpu.pipeline_mode<synchronous>, transform_indices = @transform_3, window_bounds = array<i64: 1, 128>}, {transform_indices = @transform_4, window_bounds = array<i64: 1, 8, 256>}]} {
    %c0_i32 = arith.constant 0 : i32
    %0 = arith.cmpi eq, %arg0, %c0_i32 : i32
    %c0_i32_0 = arith.constant 0 : i32
    %1 = arith.cmpi eq, %arg1, %c0_i32_0 : i32
    %2 = arith.andi %0, %1 : i1
    %3 = arith.extui %2 : i1 to i32
    %c0_i32_1 = arith.constant 0 : i32
    %4 = arith.cmpi ne, %3, %c0_i32_1 : i32
    scf.if %4 {
      %cst_21 = arith.constant 0.000000e+00 : f32
      %30 = vector.broadcast %cst_21 : f32 to vector<1x128xf32>
      %c0_22 = arith.constant 0 : index
      %c0_23 = arith.constant 0 : index
      %31 = vector.load %arg7[%c0_22, %c0_23] : memref<1x128xf32, #tpu.memory_space<vmem>>, vector<1x128xf32>
      tpu.vector_store %arg7[%c0_22, %c0_23], %30 {strides = array<i32>} : memref<1x128xf32, #tpu.memory_space<vmem>>, vector<1x128xf32>,
      %cst_24 = arith.constant 0.000000e+00 : f32
      %32 = vector.broadcast %cst_24 : f32 to vector<1x128xf32>
      %c0_25 = arith.constant 0 : index
      %c0_26 = arith.constant 0 : index
      %33 = vector.load %arg8[%c0_25, %c0_26] : memref<1x128xf32, #tpu.memory_space<vmem>>, vector<1x128xf32>
      tpu.vector_store %arg8[%c0_25, %c0_26], %32 {strides = array<i32>} : memref<1x128xf32, #tpu.memory_space<vmem>>, vector<1x128xf32>,
    } else {
    }
    %cst = arith.constant 0.000000e+00 : f32
    %5 = vector.broadcast %cst : f32 to vector<256x128xf32>
    %c0 = arith.constant 0 : index
    %c0_2 = arith.constant 0 : index
    %c0_3 = arith.constant 0 : index
    %6 = vector.load %arg2[%c0, %c0_2, %c0_3] : memref<1x288x12xbf16, #tpu.memory_space<vmem>>, vector<1x256x12xbf16>
    %7 = vector.shape_cast %6 : vector<1x256x12xbf16> to vector<256x12xbf16>
    %c0_4 = arith.constant 0 : index
    %c0_5 = arith.constant 0 : index
    %c0_6 = arith.constant 0 : index
    %8 = vector.load %arg3[%c0_4, %c0_5, %c0_6] : memref<3x12x128xbf16, #tpu.memory_space<vmem>>, vector<1x12x128xbf16>
    %9 = vector.shape_cast %8 : vector<1x12x128xbf16> to vector<12x128xbf16>
    %cst_7 = arith.constant dense<0.000000e+00> : vector<256x128xf32>
    %10 = tpu.matmul %7, %9, %cst_7 {dimension_numbers = #tpu.dot_dimension_numbers<[1], [0], [0], [1], [0, 0, 1, 1], [], []>} : vector<256x12xbf16>, vector<12x128xbf16>, vector<256x128xf32> -> vector<256x128xf32>
    %11 = arith.addf %5, %10 : vector<256x128xf32>
    %c0_8 = arith.constant 0 : index
    %c16 = arith.constant 16 : index
    %c0_9 = arith.constant 0 : index
    %12 = vector.load %arg2[%c0_8, %c16, %c0_9] : memref<1x288x12xbf16, #tpu.memory_space<vmem>>, vector<1x256x12xbf16>
    %13 = vector.shape_cast %12 : vector<1x256x12xbf16> to vector<256x12xbf16>
    %c1 = arith.constant 1 : index
    %c0_10 = arith.constant 0 : index
    %c0_11 = arith.constant 0 : index
    %14 = vector.load %arg3[%c1, %c0_10, %c0_11] : memref<3x12x128xbf16, #tpu.memory_space<vmem>>, vector<1x12x128xbf16>
    %15 = vector.shape_cast %14 : vector<1x12x128xbf16> to vector<12x128xbf16>
    %cst_12 = arith.constant dense<0.000000e+00> : vector<256x128xf32>
    %16 = tpu.matmul %13, %15, %cst_12 {dimension_numbers = #tpu.dot_dimension_numbers<[1], [0], [0], [1], [0, 0, 1, 1], [], []>} : vector<256x12xbf16>, vector<12x128xbf16>, vector<256x128xf32> -> vector<256x128xf32>
    %17 = arith.addf %11, %16 : vector<256x128xf32>
    %c0_13 = arith.constant 0 : index
    %c32 = arith.constant 32 : index
    %c0_14 = arith.constant 0 : index
    %18 = vector.load %arg2[%c0_13, %c32, %c0_14] : memref<1x288x12xbf16, #tpu.memory_space<vmem>>, vector<1x256x12xbf16>
    %19 = vector.shape_cast %18 : vector<1x256x12xbf16> to vector<256x12xbf16>
    %c2 = arith.constant 2 : index
    %c0_15 = arith.constant 0 : index
    %c0_16 = arith.constant 0 : index
    %20 = vector.load %arg3[%c2, %c0_15, %c0_16] : memref<3x12x128xbf16, #tpu.memory_space<vmem>>, vector<1x12x128xbf16>
    %21 = vector.shape_cast %20 : vector<1x12x128xbf16> to vector<12x128xbf16>
    %cst_17 = arith.constant dense<0.000000e+00> : vector<256x128xf32>
    %22 = tpu.matmul %19, %21, %cst_17 {dimension_numbers = #tpu.dot_dimension_numbers<[1], [0], [0], [1], [0, 0, 1, 1], [], []>} : vector<256x12xbf16>, vector<12x128xbf16>, vector<256x128xf32> -> vector<256x128xf32>
    %23 = arith.addf %17, %22 : vector<256x128xf32>
    %c0_i32_18 = arith.constant 0 : i32
    %24 = arith.cmpi eq, %arg0, %c0_i32_18 : i32
    %25 = arith.extui %24 : i1 to i32
    %c0_i32_19 = arith.constant 0 : i32
    %26 = arith.cmpi ne, %25, %c0_i32_19 : i32
    scf.if %26 {
      %c0_21 = arith.constant 0 : index
      %c0_22 = arith.constant 0 : index
      %30 = vector.load %arg7[%c0_21, %c0_22] : memref<1x128xf32, #tpu.memory_space<vmem>>, vector<1x128xf32>
      %cst_23 = arith.constant dense<0.000000e+00> : vector<128xf32>
      %31 = vector.multi_reduction <add>, %23, %cst_23 [0] : vector<256x128xf32> to vector<128xf32>
      %32 = vector.shape_cast %31 : vector<128xf32> to vector<1x128xf32>
      %33 = arith.addf %30, %32 : vector<1x128xf32>
      %c0_24 = arith.constant 0 : index
      %c0_25 = arith.constant 0 : index
      %34 = vector.load %arg7[%c0_24, %c0_25] : memref<1x128xf32, #tpu.memory_space<vmem>>, vector<1x128xf32>
      tpu.vector_store %arg7[%c0_24, %c0_25], %33 {strides = array<i32>} : memref<1x128xf32, #tpu.memory_space<vmem>>, vector<1x128xf32>,
      %c0_26 = arith.constant 0 : index
      %c0_27 = arith.constant 0 : index
      %35 = vector.load %arg8[%c0_26, %c0_27] : memref<1x128xf32, #tpu.memory_space<vmem>>, vector<1x128xf32>
      %36 = arith.mulf %23, %23 : vector<256x128xf32>
      %cst_28 = arith.constant dense<0.000000e+00> : vector<128xf32>
      %37 = vector.multi_reduction <add>, %36, %cst_28 [0] : vector<256x128xf32> to vector<128xf32>
      %38 = vector.shape_cast %37 : vector<128xf32> to vector<1x128xf32>
      %39 = arith.addf %35, %38 : vector<1x128xf32>
      %c0_29 = arith.constant 0 : index
      %c0_30 = arith.constant 0 : index
      %40 = vector.load %arg8[%c0_29, %c0_30] : memref<1x128xf32, #tpu.memory_space<vmem>>, vector<1x128xf32>
      tpu.vector_store %arg8[%c0_29, %c0_30], %39 {strides = array<i32>} : memref<1x128xf32, #tpu.memory_space<vmem>>, vector<1x128xf32>,
    } else {
    }
    %c1_i32 = arith.constant 1 : i32
    %27 = arith.cmpi eq, %arg0, %c1_i32 : i32
    %28 = arith.extui %27 : i1 to i32
    %c0_i32_20 = arith.constant 0 : i32
    %29 = arith.cmpi ne, %28, %c0_i32_20 : i32
    scf.if %29 {
      %c0_21 = arith.constant 0 : index
      %c0_22 = arith.constant 0 : index
      %30 = vector.load %arg7[%c0_21, %c0_22] : memref<1x128xf32, #tpu.memory_space<vmem>>, vector<1x128xf32>
      %cst_23 = arith.constant 0.001953125 : f32
      %31 = vector.broadcast %cst_23 : f32 to vector<1x128xf32>
      %32 = arith.mulf %30, %31 : vector<1x128xf32>
      %c0_24 = arith.constant 0 : index
      %c0_25 = arith.constant 0 : index
      %33 = vector.load %arg8[%c0_24, %c0_25] : memref<1x128xf32, #tpu.memory_space<vmem>>, vector<1x128xf32>
      %cst_26 = arith.constant 0.001953125 : f32
      %34 = vector.broadcast %cst_26 : f32 to vector<1x128xf32>
      %35 = arith.mulf %33, %34 : vector<1x128xf32>
      %36 = arith.mulf %32, %32 : vector<1x128xf32>
      %37 = arith.subf %35, %36 : vector<1x128xf32>
      %cst_27 = arith.constant 0.000000e+00 : f32
      %38 = vector.broadcast %cst_27 : f32 to vector<1x128xf32>
      %39 = arith.maximumf %37, %38 : vector<1x128xf32>
      %c0_28 = arith.constant 0 : index
      %c0_29 = arith.constant 0 : index
      %40 = vector.load %arg4[%c0_28, %c0_29] : memref<1x128xf32, #tpu.memory_space<vmem>>, vector<1x128xf32>
      %cst_30 = arith.constant 9.99999974E-6 : f32
      %41 = vector.broadcast %cst_30 : f32 to vector<1x128xf32>
      %42 = arith.addf %39, %41 : vector<1x128xf32>
      %43 = math.rsqrt %42 : vector<1x128xf32>
      %44 = arith.mulf %40, %43 : vector<1x128xf32>
      %c0_31 = arith.constant 0 : index
      %c0_32 = arith.constant 0 : index
      %45 = vector.load %arg5[%c0_31, %c0_32] : memref<1x128xf32, #tpu.memory_space<vmem>>, vector<1x128xf32>
      %46 = arith.mulf %32, %44 : vector<1x128xf32>
      %47 = arith.subf %45, %46 : vector<1x128xf32>
      %48 = vector.broadcast %44 : vector<1x128xf32> to vector<256x128xf32>
      %49 = arith.mulf %23, %48 : vector<256x128xf32>
      %50 = vector.broadcast %47 : vector<1x128xf32> to vector<256x128xf32>
      %51 = arith.addf %49, %50 : vector<256x128xf32>
      %cst_33 = arith.constant 0.000000e+00 : f32
      %52 = vector.broadcast %cst_33 : f32 to vector<256x128xf32>
      %53 = arith.maximumf %51, %52 : vector<256x128xf32>
      %54 = tpu.transpose %53, [1, 0] : vector<256x128xf32> -> vector<128x256xf32>
      %55 = vector.extract_strided_slice %54 {offsets = [0, 0], sizes = [8, 256], strides = [1, 1]} : vector<128x256xf32> to vector<8x256xf32>
      %c0_34 = arith.constant 0 : index
      %c0_35 = arith.constant 0 : index
      %c0_36 = arith.constant 0 : index
      %56 = vector.load %arg6[%c0_34, %c0_35, %c0_36] : memref<1x8x256xf32, #tpu.memory_space<vmem>>, vector<1x8x256xf32>
      %57 = vector.shape_cast %56 : vector<1x8x256xf32> to vector<8x256xf32>
      %58 = vector.shape_cast %55 : vector<8x256xf32> to vector<1x8x256xf32>
      tpu.vector_store %arg6[%c0_34, %c0_35, %c0_36], %58 {strides = array<i32>} : memref<1x8x256xf32, #tpu.memory_space<vmem>>, vector<1x8x256xf32>,
    } else {
    }
    return
  }
  func.func @transform_0(%arg0: i32, %arg1: i32) -> (i32, i32, i32) {
    %c0_i32 = arith.constant 0 : i32
    %c0_i32_0 = arith.constant 0 : i32
    %c0_i32_1 = arith.constant 0 : i32
    return %arg1, %c0_i32, %c0_i32_0 : i32, i32, i32
  }
  func.func @transform_1(%arg0: i32, %arg1: i32) -> (i32, i32, i32) {
    %c0_i32 = arith.constant 0 : i32
    %c0_i32_0 = arith.constant 0 : i32
    %c0_i32_1 = arith.constant 0 : i32
    %c0_i32_2 = arith.constant 0 : i32
    return %c0_i32, %c0_i32_0, %c0_i32_1 : i32, i32, i32
  }
  func.func @transform_2(%arg0: i32, %arg1: i32) -> (i32, i32) {
    %c0_i32 = arith.constant 0 : i32
    %c0_i32_0 = arith.constant 0 : i32
    %c0_i32_1 = arith.constant 0 : i32
    return %c0_i32, %c0_i32_0 : i32, i32
  }
  func.func @transform_3(%arg0: i32, %arg1: i32) -> (i32, i32) {
    %c0_i32 = arith.constant 0 : i32
    %c0_i32_0 = arith.constant 0 : i32
    %c0_i32_1 = arith.constant 0 : i32
    return %c0_i32, %c0_i32_0 : i32, i32
  }
  func.func @transform_4(%arg0: i32, %arg1: i32) -> (i32, i32, i32) {
    %c0_i32 = arith.constant 0 : i32
    %c0_i32_0 = arith.constant 0 : i32
    %c0_i32_1 = arith.constant 0 : i32
    return %arg1, %c0_i32, %c0_i32_0 : i32, i32, i32
  }
}

</mosaic_0001>

<llo_original>
// kernel: conv_block.1
$region0: #{conv_block.1}
  #allocation0 [shape = 'u32[]', space=smem, size = 0x4, offset = 0x4, fixed_abs, tag = 'smem constant byte address 0x4 - core index']
  #allocation1 [shape = 'u32[144,128]{1,0:T(1,128)}', space=vmem, size = 0x12000, scoped, tag = 'internal scratch']
  #allocation2 [shape = 'f32[1,128]{1,0:T(1,128)}', space=vmem, size = 0x200, scoped, tag = 'scratch operand']
  #allocation3 [shape = 'f32[1,128]{1,0:T(1,128)}', space=vmem, size = 0x200, scoped, tag = 'scratch operand']
  %s0 = inlined_call_operand.vmem [shape: bf16[2,288,12], index: 0, kind: input, shape index: {}]
  %s1 = inlined_call_operand.vmem [shape: bf16[3,12,128], index: 1, kind: input, shape index: {}]
  %s2 = inlined_call_operand.vmem [shape: f32[1,128], index: 2, kind: input, shape index: {}]
  %s3 = inlined_call_operand.vmem [shape: f32[1,128], index: 3, kind: input, shape index: {}]
  %s4 = inlined_call_operand.vmem [shape: f32[2,8,256], index: 4, kind: output, shape index: {}]
  %s5 = sld [smem:[#allocation0]]
  $region61: #{conv_block.1} parent=0
    _
  %s7 = ssub.s32 1, %s5
  %s8 = scalar_select 0, %s7, %s5
  loop: start=0, step=1, limit=6
  $region2: #{conv_block.1} parent=0 // loop_pre_header
    _
  $region3: #{conv_block.1} parent=0 // loop_header
    %s10 = sphi 0, %s14
    %p11 = scmp.ge.s32.totalorder %s10, 6
    %s17 = sphi 0, %s29
    %s18 = sphi 0, %s25
    %s19 = sphi 0, %s17
    %s20 = sphi 0, %s18
    %s21 = sphi 0, %s19
    %s22 = sphi 0, %s20
    %s32 = sphi 0, %s34
    %s35 = sphi 0, %s32
    %s36 = sphi 0, %s35
    %s52 = sphi 0, %s36
    %s56 = sphi 0, %s56
    %s58 = sphi 0, %s56
    %s59 = sphi 0, %s58
    %s73 = sphi 0, %s59
    %s77 = sphi 0, %s77
    %s79 = sphi 0, %s77
    %s80 = sphi 0, %s79
    %s94 = sphi 0, %s80
    %s98 = sphi 0, %s98
    %s100 = sphi 0, %s98
    %s101 = sphi 0, %s100
    %s115 = sphi 0, %s101
    %s121 = sphi 0, %s123
    %s124 = sphi 0, %s121
    %s125 = sphi 0, %s124
    %s141 = sphi 0, %s125
  $region4: #{conv_block.1} parent=0 // loop_header_branch
    %13 = sbr.rel (%p11) target = $region8
  $region5: #{conv_block.1} parent=0 // loop_body
    %s15 = ssub.s32 %s10, 1
    %s16 = ssub.s32 %s10, 2
    %s23 = sadd.s32 1, %s18
    %p24 = scmp.ge.s32.totalorder %s23, 2
    %s25 = scalar_select %p24, 0, %s23
    %s26 = sadd.s32 1, %s17
    %s27 = scalar_select %p24, %s26, %s17
    %p28 = scmp.ge.s32.totalorder %s27, 2
    %s29 = scalar_select %p28, 0, %s27
    %s30 = ssub.s32 %s18, %s25
    %p31 = scmp.eq.s32.totalorder %s30, 0
    %s33 = sadd.s32 %s32, 1
    %s34 = scalar_select %p31, %s32, %s33
    %p37 = pneg %p31
    %p38 = scmp.eq.s32.totalorder %s10, 3
    %p39 = por %p37, %p38
    %p40 = scmp.ne.s32.totalorder %s32, %s35
    %p41 = scmp.eq.s32.totalorder %s10, 0
    %p42 = por %p40, %p41
    %p43 = scmp.ne.s32.totalorder %s32, %s35
    %p44 = scmp.eq.s32.totalorder %s15, 3
    %p45 = por %p43, %p44
    %p46 = scmp.ne.s32.totalorder %s35, %s36
    %p47 = scmp.eq.s32.totalorder %s15, 0
    %p48 = por %p46, %p47
    %p49 = scmp.ne.s32.totalorder %s35, %s36
    %p50 = scmp.eq.s32.totalorder %s16, 3
    %p51 = por %p49, %p50
    %p53 = scmp.ne.s32.totalorder %s36, %s52
    %p54 = scmp.eq.s32.totalorder %s16, 0
    %p55 = por %p53, %p54
    %s57 = sadd.s32 %s56, 1
    %p60 = scmp.eq.s32.totalorder %s10, 3
    %p61 = scmp.ne.s32.totalorder %s56, %s58
    %p62 = scmp.eq.s32.totalorder %s10, 0
    %p63 = por %p61, %p62
    %p64 = scmp.ne.s32.totalorder %s56, %s58
    %p65 = scmp.eq.s32.totalorder %s15, 3
    %p66 = por %p64, %p65
    %p67 = scmp.ne.s32.totalorder %s58, %s59
    %p68 = scmp.eq.s32.totalorder %s15, 0
    %p69 = por %p67, %p68
    %p70 = scmp.ne.s32.totalorder %s58, %s59
    %p71 = scmp.eq.s32.totalorder %s16, 3
    %p72 = por %p70, %p71
    %p74 = scmp.ne.s32.totalorder %s59, %s73
    %p75 = scmp.eq.s32.totalorder %s16, 0
    %p76 = por %p74, %p75
    %s78 = sadd.s32 %s77, 1
    %p81 = scmp.eq.s32.totalorder %s10, 3
    %p82 = scmp.ne.s32.totalorder %s77, %s79
    %p83 = scmp.eq.s32.totalorder %s10, 0
    %p84 = por %p82, %p83
    %p85 = scmp.ne.s32.totalorder %s77, %s79
    %p86 = scmp.eq.s32.totalorder %s15, 3
    %p87 = por %p85, %p86
    %p88 = scmp.ne.s32.totalorder %s79, %s80
    %p89 = scmp.eq.s32.totalorder %s15, 0
    %p90 = por %p88, %p89
    %p91 = scmp.ne.s32.totalorder %s79, %s80
    %p92 = scmp.eq.s32.totalorder %s16, 3
    %p93 = por %p91, %p92
    %p95 = scmp.ne.s32.totalorder %s80, %s94
    %p96 = scmp.eq.s32.totalorder %s16, 0
    %p97 = por %p95, %p96
    %s99 = sadd.s32 %s98, 1
    %p102 = scmp.eq.s32.totalorder %s10, 3
    %p103 = scmp.ne.s32.totalorder %s98, %s100
    %p104 = scmp.eq.s32.totalorder %s10, 0
    %p105 = por %p103, %p104
    %p106 = scmp.ne.s32.totalorder %s98, %s100
    %p107 = scmp.eq.s32.totalorder %s15, 3
    %p108 = por %p106, %p107
    %p109 = scmp.ne.s32.totalorder %s100, %s101
    %p110 = scmp.eq.s32.totalorder %s15, 0
    %p111 = por %p109, %p110
    %p112 = scmp.ne.s32.totalorder %s100, %s101
    %p113 = scmp.eq.s32.totalorder %s16, 3
    %p114 = por %p112, %p113
    %p116 = scmp.ne.s32.totalorder %s101, %s115
    %p117 = scmp.eq.s32.totalorder %s16, 0
    %p118 = por %p116, %p117
    %s119 = ssub.s32 %s18, %s25
    %p120 = scmp.eq.s32.totalorder %s119, 0
    %s122 = sadd.s32 %s121, 1
    %s123 = scalar_select %p120, %s121, %s122
    %p126 = pneg %p120
    %p127 = scmp.eq.s32.totalorder %s10, 3
    %p128 = por %p126, %p127
    %p129 = scmp.ne.s32.totalorder %s121, %s124
    %p130 = scmp.eq.s32.totalorder %s10, 0
    %p131 = por %p129, %p130
    %p132 = scmp.ne.s32.totalorder %s121, %s124
    %p133 = scmp.eq.s32.totalorder %s15, 3
    %p134 = por %p132, %p133
    %p135 = scmp.ne.s32.totalorder %s124, %s125
    %p136 = scmp.eq.s32.totalorder %s15, 0
    %p137 = por %p135, %p136
    %p138 = scmp.ne.s32.totalorder %s124, %s125
    %p139 = scmp.eq.s32.totalorder %s16, 3
    %p140 = por %p138, %p139
    %p142 = scmp.ne.s32.totalorder %s125, %s141
    %p143 = scmp.eq.s32.totalorder %s16, 0
    %p144 = por %p142, %p143
    %p145 = scmp.le.s32.totalorder 1, %s10
    %p146 = scmp.lt.s32.totalorder %s10, 5
    %p147 = pnand %p145, %p146
    %p148 = pneg %p147
    // Predicated region
    $region9: #{conv_block.1} parent=5 // pred_check
      _
    $region10: #{conv_block.1} parent=5 // pred_check_branch
      %150 = sbr.rel (%p147) target = $region12
    $region11: #{conv_block.1} parent=5 // pred_region
      %s151 = ssub.s32 %s10, 1
      // Predicated region
      $region13: #{conv_block.1} parent=11 // pred_check
        %p152 = pneg %p69
      $region14: #{conv_block.1} parent=11 // pred_check_branch
        %154 = sbr.rel (%p152) target = $region16
      $region15: #{conv_block.1} parent=11 // pred_region
        _
      $region16: #{conv_block.1} parent=11 // pred_fallthru
        _
      // Predicated region
      $region17: #{conv_block.1} parent=11 // pred_check
        %p155 = pneg %p90
      $region18: #{conv_block.1} parent=11 // pred_check_branch
        %157 = sbr.rel (%p155) target = $region20
      $region19: #{conv_block.1} parent=11 // pred_region
        _
      $region20: #{conv_block.1} parent=11 // pred_fallthru
        _
      // Predicated region
      $region21: #{conv_block.1} parent=11 // pred_check
        %p158 = pneg %p111
      $region22: #{conv_block.1} parent=11 // pred_check_branch
        %160 = sbr.rel (%p158) target = $region24
      $region23: #{conv_block.1} parent=11 // pred_region
        _
      $region24: #{conv_block.1} parent=11 // pred_fallthru
        _
    $region12: #{conv_block.1} parent=5 // pred_fallthru
      _
    %p161 = scmp.lt.s32.totalorder %s10, 4
    // Predicated region
    $region25: #{conv_block.1} parent=5 // pred_check
      %p162 = pneg %p161
    $region26: #{conv_block.1} parent=5 // pred_check_branch
      %164 = sbr.rel (%p162) target = $region28
    $region27: #{conv_block.1} parent=5 // pred_region
      // Predicated region
      $region29: #{conv_block.1} parent=27 // pred_check
        %p165 = pneg %p42
      $region30: #{conv_block.1} parent=27 // pred_check_branch
        %167 = sbr.rel (%p165) target = $region32
      $region31: #{conv_block.1} parent=27 // pred_region
        %p168 = scmp.lt.s32.totalorder %s18, 1
        %s169 = scalar_select %p168, %s18, 1
        %s170 = smul.addr %s169, 36
        %s171 = smul.addr %s170, 4
        %s172 = scalar_lea.vmem %s0, %s171
      $region32: #{conv_block.1} parent=27 // pred_fallthru
        _
    $region28: #{conv_block.1} parent=5 // pred_fallthru
      _
    %p173 = scmp.le.s32.totalorder 1, %s10
    %p174 = scmp.lt.s32.totalorder %s10, 5
    %p175 = pnand %p173, %p174
    %p176 = pneg %p175
    // Predicated region
    $region33: #{conv_block.1} parent=5 // pred_check
      _
    $region34: #{conv_block.1} parent=5 // pred_check_branch
      %178 = sbr.rel (%p175) target = $region36
    $region35: #{conv_block.1} parent=5 // pred_region
      %s179 = ssub.s32 %s10, 1
      %p180 = scmp.lt.s32.totalorder %s20, 1
      %s181 = scalar_select %p180, %s20, 1
      %s182 = smul.addr %s181, 36
      %s183 = smul.addr %s182, 4
      %s184 = scalar_lea.vmem %s0, %s183
      %p185 = pneg %p48
      %p186 = pneg %p45
      %p187 = pneg %p69
      %p188 = pneg %p66
      %p189 = pneg %p90
      %p190 = pneg %p87
      %p191 = pneg %p111
      %p192 = pneg %p108
      %p193 = pneg %p137
      %p194 = pneg %p134
      %p195 = scmp.lt.s32.totalorder %s20, 1
      %s196 = scalar_select %p195, %s20, 1
      %s197 = smul.addr %s196, 2
      %s198 = smul.addr %s197, 8
      %s199 = scalar_lea.vmem %s4, %s198
      %p200 = scmp.lt.s32.totalorder %s20, 1
      %s201 = scalar_select %p200, %s20, 1
      %s202 = smul.addr %s201, 36
      %s203 = smul.addr %s202, 4
      %s204 = scalar_lea.vmem %s0, %s203
      %p205 = scmp.lt.s32.totalorder %s20, 1
      %s206 = scalar_select %p205, %s20, 1
      %s207 = smul.addr %s206, 2
      %s208 = smul.addr %s207, 8
      %s209 = scalar_lea.vmem %s4, %s208
      %p211 = scmp.eq.s32.totalorder %s19, 0
      %p212 = scmp.eq.s32.totalorder %s20, 0
      %p213 = pnand %p211, %p212
      %p214 = pneg %p213
      // Predicated region
      $region37: #{conv_block.1} parent=35 // pred_check
        _
      $region38: #{conv_block.1} parent=35 // pred_check_branch
        %216 = sbr.rel (%p213) target = $region40
      $region39: #{conv_block.1} parent=35 // pred_region
        %217 = vst [vmem:[#allocation2] sm:$0x1] 0.0
        %218 = vst [vmem:[#allocation3] sm:$0x1] 0.0
      $region40: #{conv_block.1} parent=35 // pred_fallthru
        _
      %v219 = vld [vmem:[%s204] sm:$0xf]
      %v220 = vld [vmem:[%s204 + $0x4] sm:$0xf]
      %v221 = vld [vmem:[%s204 + $0x8] sm:$0xf]
      %v222 = vld [vmem:[%s204 + $0xc] sm:$0xf]
      %v223 = vld [vmem:[%s204 + $0x10] sm:$0xf]
      %v224 = vld [vmem:[%s204 + $0x14] sm:$0xf]
      %v225 = vld [vmem:[%s204 + $0x18] sm:$0xf]
      %v226 = vld [vmem:[%s204 + $0x1c] sm:$0xf]
      %v227 = vld [vmem:[%s204 + $0x20] sm:$0xf]
      %v228 = vld [vmem:[%s204 + $0x24] sm:$0xf]
      %v229 = vld [vmem:[%s204 + $0x28] sm:$0xf]
      %v230 = vld [vmem:[%s204 + $0x2c] sm:$0xf]
      %v231 = vld [vmem:[%s204 + $0x30] sm:$0xf]
      %v232 = vld [vmem:[%s204 + $0x34] sm:$0xf]
      %v233 = vld [vmem:[%s204 + $0x38] sm:$0xf]
      %v234 = vld [vmem:[%s204 + $0x3c] sm:$0xf]
      %v235 = vld [vmem:[%s204 + $0x40] sm:$0xf]
      %v236 = vld [vmem:[%s204 + $0x44] sm:$0xf]
      %v237 = vld [vmem:[%s204 + $0x48] sm:$0xf]
      %v238 = vld [vmem:[%s204 + $0x4c] sm:$0xf]
      %v239 = vld [vmem:[%s204 + $0x50] sm:$0xf]
      %v240 = vld [vmem:[%s204 + $0x54] sm:$0xf]
      %v241 = vld [vmem:[%s204 + $0x58] sm:$0xf]
      %v242 = vld [vmem:[%s204 + $0x5c] sm:$0xf]
      %v243 = vld [vmem:[%s204 + $0x60] sm:$0xf]
      %v244 = vld [vmem:[%s204 + $0x64] sm:$0xf]
      %v245 = vld [vmem:[%s204 + $0x68] sm:$0xf]
      %v246 = vld [vmem:[%s204 + $0x6c] sm:$0xf]
      %v247 = vld [vmem:[%s204 + $0x70] sm:$0xf]
      %v248 = vld [vmem:[%s204 + $0x74] sm:$0xf]
      %v249 = vld [vmem:[%s204 + $0x78] sm:$0xf]
      %v250 = vld [vmem:[%s204 + $0x7c] sm:$0xf]
      %v251 = vld [vmem:[%s1] sm:$0xf]
      %v252 = vld [vmem:[%s1 + $0x4] sm:$0x3]
      %v253 = vld [vmem:[%s204 + $0x80] sm:$0xf]
      %v254 = vld [vmem:[%s204 + $0x84] sm:$0xf]
      %s255 = scalar_lea.vmem %s1, 8
      %v256 = vld [vmem:[%s255] sm:$0xf]
      %v257 = vld [vmem:[%s255 + $0x4] sm:$0x3]
      %v290 = vunpack.c.l.b16 %v221
      %v291 = vunpack.c.l.b16 %v222
      %v292 = vunpack.c.l.b16 %v223
      %v293 = vunpack.c.l.b16 %v224
      %v294 = vunpack.c.l.b16 %v225
      %v295 = vunpack.c.l.b16 %v226
      %v296 = vunpack.c.l.b16 %v227
      %v297 = vunpack.c.l.b16 %v228
      %v298 = vunpack.c.l.b16 %v229
      %v299 = vunpack.c.l.b16 %v230
      %v300 = vunpack.c.l.b16 %v231
      %v301 = vunpack.c.l.b16 %v232
      %v302 = vunpack.c.l.b16 %v233
      %v303 = vunpack.c.l.b16 %v234
      %v304 = vunpack.c.l.b16 %v235
      %v305 = vunpack.c.l.b16 %v236
      %v306 = vunpack.c.l.b16 %v237
      %v307 = vunpack.c.l.b16 %v238
      %v308 = vunpack.c.l.b16 %v239
      %v309 = vunpack.c.l.b16 %v240
      %v310 = vunpack.c.l.b16 %v241
      %v311 = vunpack.c.l.b16 %v242
      %v312 = vunpack.c.l.b16 %v243
      %v313 = vunpack.c.l.b16 %v244
      %v314 = vunpack.c.l.b16 %v245
      %v315 = vunpack.c.l.b16 %v246
      %v316 = vunpack.c.l.b16 %v247
      %v317 = vunpack.c.l.b16 %v248
      %v318 = vunpack.c.l.b16 %v249
      %v319 = vunpack.c.l.b16 %v250
      %v320 = vunpack.c.l.b16 %v253
      %v321 = vunpack.c.l.b16 %v254
      %v322 = vpack.c.b16 %v291, %v290
      %v323 = vpack.c.b16 %v293, %v292
      %v324 = vpack.c.b16 %v295, %v294
      %v325 = vpack.c.b16 %v297, %v296
      %v326 = vpack.c.b16 %v299, %v298
      %v327 = vpack.c.b16 %v301, %v300
      %v328 = vpack.c.b16 %v303, %v302
      %v329 = vpack.c.b16 %v305, %v304
      %v330 = vpack.c.b16 %v307, %v306
      %v331 = vpack.c.b16 %v309, %v308
      %v332 = vpack.c.b16 %v311, %v310
      %v333 = vpack.c.b16 %v313, %v312
      %v334 = vpack.c.b16 %v315, %v314
      %v335 = vpack.c.b16 %v317, %v316
      %v336 = vpack.c.b16 %v319, %v318
      %v337 = vpack.c.b16 %v321, %v320
      %v340 = vunpack.c.l.b16 %v256
      %v341 = vunpack.c.l.b16 %v257
      %v342 = vpack.c.b16 %v341, %v340
      %vm343 = vcmask 97280
      %v345 = vsel %vm343, %v322, 0
      %v348 = vsel %vm343, %v323, 0
      %v351 = vsel %vm343, %v324, 0
      %v354 = vsel %vm343, %v325, 0
      %v357 = vsel %vm343, %v326, 0
      %v360 = vsel %vm343, %v327, 0
      %v363 = vsel %vm343, %v328, 0
      %v366 = vsel %vm343, %v329, 0
      %v369 = vsel %vm343, %v330, 0
      %v372 = vsel %vm343, %v331, 0
      %v375 = vsel %vm343, %v332, 0
      %v378 = vsel %vm343, %v333, 0
      %v381 = vsel %vm343, %v334, 0
      %v384 = vsel %vm343, %v335, 0
      %v387 = vsel %vm343, %v336, 0
      %v390 = vsel %vm343, %v337, 0
      %vm392 = vcmask 1045504
      %v394 = vsel %vm392, %v342, 0
      %396 = vmatprep.subr.bf16.mxu0 0
      %397 = vmatpush1.bf16.msra.mxu0 %v394
      %398 = vmatprep.subr.bf16.mxu0 0
      %399 = vmatpush1.bf16.msra.mxu0 0
      %400 = vmatprep.subr.bf16.mxu0 0
      %401 = vmatpush1.bf16.msra.mxu0 0
      %402 = vmatprep.subr.bf16.mxu0 0
      %403 = vmatpush1.bf16.msra.mxu0 0
      %404 = vmatprep.subr.bf16.mxu0 0
      %405 = vmatpush1.bf16.msra.mxu0 0
      %406 = vmatprep.subr.bf16.mxu0 0
      %407 = vmatpush1.bf16.msra.mxu0 0
      %408 = vmatprep.subr.bf16.mxu0 0
      %409 = vmatpush1.bf16.msra.mxu0 0
      %410 = vmatprep.subr.bf16.mxu0 0
      %411 = vmatpush1.bf16.msra.mxu0 0
      %412 = vmatprep.subr.bf16.mxu0 0
      %413 = vmatpush1.bf16.msra.mxu0 0
      %414 = vmatprep.subr.bf16.mxu0 0
      %415 = vmatpush1.bf16.msra.mxu0 0
      %416 = vmatprep.subr.bf16.mxu0 0
      %417 = vmatpush1.bf16.msra.mxu0 0
      %418 = vmatprep.subr.bf16.mxu0 0
      %419 = vmatpush1.bf16.msra.mxu0 0
      %420 = vmatprep.subr.bf16.mxu0 0
      %421 = vmatpush1.bf16.msra.mxu0 0
      %422 = vmatprep.subr.bf16.mxu0 0
      %423 = vmatpush1.bf16.msra.mxu0 0
      %424 = vmatprep.subr.bf16.mxu0 0
      %425 = vmatpush1.bf16.msra.mxu0 0
      %426 = vmatprep.subr.bf16.mxu0 0
      %427 = vmatpush1.bf16.msra.mxu0 0
      %428 = vmatprep.mubr.bf16.mxu0 0
      %429 = vmatmul.mubr.bf16.gmra.mrb[0].mxu0 %v345
      %v430 = vpop.f32.mrb[0].mxu0
      %v431 = vadd.f32 0.0, %v430
      %v432 = vpop.f32.mrb[0].mxu0
      %v433 = vpop.f32.mrb[0].mxu0
      %v434 = vadd.f32 0.0, %v433
      %v435 = vpop.f32.mrb[0].mxu0
      %436 = vmatprep.mubr.bf16.mxu0 0
      %437 = vmatmul.mubr.bf16.gmra.mrb[0].mxu0 %v348
      %v438 = vpop.f32.mrb[0].mxu0
      %v439 = vadd.f32 0.0, %v438
      %v440 = vpop.f32.mrb[0].mxu0
      %v441 = vpop.f32.mrb[0].mxu0
      %v442 = vadd.f32 0.0, %v441
      %v443 = vpop.f32.mrb[0].mxu0
      %444 = vmatprep.mubr.bf16.mxu0 0
      %445 = vmatmul.mubr.bf16.gmra.mrb[0].mxu0 %v351
      %v446 = vpop.f32.mrb[0].mxu0
      %v447 = vadd.f32 0.0, %v446
      %v448 = vpop.f32.mrb[0].mxu0
      %v449 = vpop.f32.mrb[0].mxu0
      %v450 = vadd.f32 0.0, %v449
      %v451 = vpop.f32.mrb[0].mxu0
      %452 = vmatprep.mubr.bf16.mxu0 0
      %453 = vmatmul.mubr.bf16.gmra.mrb[0].mxu0 %v354
      %v454 = vpop.f32.mrb[0].mxu0
      %v455 = vadd.f32 0.0, %v454
      %v456 = vpop.f32.mrb[0].mxu0
      %v457 = vpop.f32.mrb[0].mxu0
      %v458 = vadd.f32 0.0, %v457
      %v459 = vpop.f32.mrb[0].mxu0
      %460 = vmatprep.mubr.bf16.mxu0 0
      %461 = vmatmul.mubr.bf16.gmra.mrb[0].mxu0 %v357
      %v462 = vpop.f32.mrb[0].mxu0
      %v463 = vadd.f32 0.0, %v462
      %v464 = vpop.f32.mrb[0].mxu0
      %v465 = vpop.f32.mrb[0].mxu0
      %v466 = vadd.f32 0.0, %v465
      %v467 = vpop.f32.mrb[0].mxu0
      %468 = vmatprep.mubr.bf16.mxu0 0
      %469 = vmatmul.mubr.bf16.gmra.mrb[0].mxu0 %v360
      %v470 = vpop.f32.mrb[0].mxu0
      %v471 = vadd.f32 0.0, %v470
      %v472 = vpop.f32.mrb[0].mxu0
      %v473 = vpop.f32.mrb[0].mxu0
      %v474 = vadd.f32 0.0, %v473
      %v475 = vpop.f32.mrb[0].mxu0
      %476 = vmatprep.mubr.bf16.mxu0 0
      %477 = vmatmul.mubr.bf16.gmra.mrb[0].mxu0 %v363
      %v478 = vpop.f32.mrb[0].mxu0
      %v479 = vadd.f32 0.0, %v478
      %v480 = vpop.f32.mrb[0].mxu0
      %v481 = vpop.f32.mrb[0].mxu0
      %v482 = vadd.f32 0.0, %v481
      %v483 = vpop.f32.mrb[0].mxu0
      %484 = vmatprep.mubr.bf16.mxu0 0
      %485 = vmatmul.mubr.bf16.gmra.mrb[0].mxu0 %v366
      %v486 = vpop.f32.mrb[0].mxu0
      %v487 = vadd.f32 0.0, %v486
      %v488 = vpop.f32.mrb[0].mxu0
      %v489 = vpop.f32.mrb[0].mxu0
      %v490 = vadd.f32 0.0, %v489
      %v491 = vpop.f32.mrb[0].mxu0
      %492 = vmatprep.mubr.bf16.mxu0 0
      %493 = vmatmul.mubr.bf16.gmra.mrb[0].mxu0 %v369
      %v494 = vpop.f32.mrb[0].mxu0
      %v495 = vadd.f32 0.0, %v494
      %v496 = vpop.f32.mrb[0].mxu0
      %v497 = vpop.f32.mrb[0].mxu0
      %v498 = vadd.f32 0.0, %v497
      %v499 = vpop.f32.mrb[0].mxu0
      %500 = vmatprep.mubr.bf16.mxu0 0
      %501 = vmatmul.mubr.bf16.gmra.mrb[0].mxu0 %v372
      %v502 = vpop.f32.mrb[0].mxu0
      %v503 = vadd.f32 0.0, %v502
      %v504 = vpop.f32.mrb[0].mxu0
      %v505 = vpop.f32.mrb[0].mxu0
      %v506 = vadd.f32 0.0, %v505
      %v507 = vpop.f32.mrb[0].mxu0
      %508 = vmatprep.mubr.bf16.mxu0 0
      %509 = vmatmul.mubr.bf16.gmra.mrb[0].mxu0 %v375
      %v510 = vpop.f32.mrb[0].mxu0
      %v511 = vadd.f32 0.0, %v510
      %v512 = vpop.f32.mrb[0].mxu0
      %v513 = vpop.f32.mrb[0].mxu0
      %v514 = vadd.f32 0.0, %v513
      %v515 = vpop.f32.mrb[0].mxu0
      %516 = vmatprep.mubr.bf16.mxu0 0
      %517 = vmatmul.mubr.bf16.gmra.mrb[0].mxu0 %v378
      %v518 = vpop.f32.mrb[0].mxu0
      %v519 = vadd.f32 0.0, %v518
      %v520 = vpop.f32.mrb[0].mxu0
      %v521 = vpop.f32.mrb[0].mxu0
      %v522 = vadd.f32 0.0, %v521
      %v523 = vpop.f32.mrb[0].mxu0
      %524 = vmatprep.mubr.bf16.mxu0 0
      %525 = vmatmul.mubr.bf16.gmra.mrb[0].mxu0 %v381
      %v526 = vpop.f32.mrb[0].mxu0
      %v527 = vadd.f32 0.0, %v526
      %v528 = vpop.f32.mrb[0].mxu0
      %v529 = vpop.f32.mrb[0].mxu0
      %v530 = vadd.f32 0.0, %v529
      %v531 = vpop.f32.mrb[0].mxu0
      %532 = vmatprep.mubr.bf16.mxu0 0
      %533 = vmatmul.mubr.bf16.gmra.mrb[0].mxu0 %v384
      %v534 = vpop.f32.mrb[0].mxu0
      %v535 = vadd.f32 0.0, %v534
      %v536 = vpop.f32.mrb[0].mxu0
      %v537 = vpop.f32.mrb[0].mxu0
      %v538 = vadd.f32 0.0, %v537
      %v539 = vpop.f32.mrb[0].mxu0
      %540 = vmatprep.mubr.bf16.mxu0 0
      %541 = vmatmul.mubr.bf16.gmra.mrb[0].mxu0 %v387
      %v542 = vpop.f32.mrb[0].mxu0
      %v543 = vadd.f32 0.0, %v542
      %v544 = vpop.f32.mrb[0].mxu0
      %v545 = vpop.f32.mrb[0].mxu0
      %v546 = vadd.f32 0.0, %v545
      %v547 = vpop.f32.mrb[0].mxu0
      %548 = vmatprep.mubr.bf16.mxu0 0
      %549 = vmatmul.mubr.bf16.gmra.mrb[0].mxu0 %v390
      %v550 = vpop.f32.mrb[0].mxu0
      %v551 = vadd.f32 0.0, %v550
      %v552 = vpop.f32.mrb[0].mxu0
      %v553 = vpop.f32.mrb[0].mxu0
      %v554 = vadd.f32 0.0, %v553
      %v555 = vpop.f32.mrb[0].mxu0
      %556 = vdwg.mxu0
      %v559 = vunpack.c.l.b16 %v219
      %v560 = vunpack.c.l.b16 %v220
      %v561 = vpack.c.b16 %v560, %v559
      %v564 = vunpack.c.l.b16 %v251
      %v565 = vunpack.c.l.b16 %v252
      %v566 = vpack.c.b16 %v565, %v564
      %v568 = vsel %vm343, %v561, 0
      %v571 = vsel %vm392, %v566, 0
      %573 = vmatprep.subr.bf16.mxu0 0
      %574 = vmatpush1.bf16.msra.mxu0 %v571
      %575 = vmatprep.subr.bf16.mxu0 0
      %576 = vmatpush1.bf16.msra.mxu0 0
      %577 = vmatprep.subr.bf16.mxu0 0
      %578 = vmatpush1.bf16.msra.mxu0 0
      %579 = vmatprep.subr.bf16.mxu0 0
      %580 = vmatpush1.bf16.msra.mxu0 0
      %581 = vmatprep.subr.bf16.mxu0 0
      %582 = vmatpush1.bf16.msra.mxu0 0
      %583 = vmatprep.subr.bf16.mxu0 0
      %584 = vmatpush1.bf16.msra.mxu0 0
      %585 = vmatprep.subr.bf16.mxu0 0
      %586 = vmatpush1.bf16.msra.mxu0 0
      %587 = vmatprep.subr.bf16.mxu0 0
      %588 = vmatpush1.bf16.msra.mxu0 0
      %589 = vmatprep.subr.bf16.mxu0 0
      %590 = vmatpush1.bf16.msra.mxu0 0
      %591 = vmatprep.subr.bf16.mxu0 0
      %592 = vmatpush1.bf16.msra.mxu0 0
      %593 = vmatprep.subr.bf16.mxu0 0
      %594 = vmatpush1.bf16.msra.mxu0 0
      %595 = vmatprep.subr.bf16.mxu0 0
      %596 = vmatpush1.bf16.msra.mxu0 0
      %597 = vmatprep.subr.bf16.mxu0 0
      %598 = vmatpush1.bf16.msra.mxu0 0
      %599 = vmatprep.subr.bf16.mxu0 0
      %600 = vmatpush1.bf16.msra.mxu0 0
      %601 = vmatprep.subr.bf16.mxu0 0
      %602 = vmatpush1.bf16.msra.mxu0 0
      %603 = vmatprep.subr.bf16.mxu0 0
      %604 = vmatpush1.bf16.msra.mxu0 0
      %605 = vmatprep.mubr.bf16.mxu0 0
      %606 = vmatmul.mubr.bf16.gmra.mrb[0].mxu0 %v568
      %v607 = vpop.f32.mrb[0].mxu0
      %v608 = vadd.f32 %v431, %v607
      %v609 = vpop.f32.mrb[0].mxu0
      %v610 = vpop.f32.mrb[0].mxu0
      %v611 = vadd.f32 %v434, %v610
      %v612 = vpop.f32.mrb[0].mxu0
      %613 = vmatprep.mubr.bf16.mxu0 0
      %614 = vmatmul.mubr.bf16.gmra.mrb[0].mxu0 %v345
      %v615 = vpop.f32.mrb[0].mxu0
      %v616 = vadd.f32 %v439, %v615
      %v617 = vpop.f32.mrb[0].mxu0
      %v618 = vpop.f32.mrb[0].mxu0
      %v619 = vadd.f32 %v442, %v618
      %v620 = vpop.f32.mrb[0].mxu0
      %621 = vmatprep.mubr.bf16.mxu0 0
      %622 = vmatmul.mubr.bf16.gmra.mrb[0].mxu0 %v348
      %v623 = vpop.f32.mrb[0].mxu0
      %v624 = vadd.f32 %v447, %v623
      %v625 = vpop.f32.mrb[0].mxu0
      %v626 = vpop.f32.mrb[0].mxu0
      %v627 = vadd.f32 %v450, %v626
      %v628 = vpop.f32.mrb[0].mxu0
      %629 = vmatprep.mubr.bf16.mxu0 0
      %630 = vmatmul.mubr.bf16.gmra.mrb[0].mxu0 %v351
      %v631 = vpop.f32.mrb[0].mxu0
      %v632 = vadd.f32 %v455, %v631
      %v633 = vpop.f32.mrb[0].mxu0
      %v634 = vpop.f32.mrb[0].mxu0
      %v635 = vadd.f32 %v458, %v634
      %v636 = vpop.f32.mrb[0].mxu0
      %637 = vmatprep.mubr.bf16.mxu0 0
      %638 = vmatmul.mubr.bf16.gmra.mrb[0].mxu0 %v354
      %v639 = vpop.f32.mrb[0].mxu0
      %v640 = vadd.f32 %v463, %v639
      %v641 = vpop.f32.mrb[0].mxu0
      %v642 = vpop.f32.mrb[0].mxu0
      %v643 = vadd.f32 %v466, %v642
      %v644 = vpop.f32.mrb[0].mxu0
      %645 = vmatprep.mubr.bf16.mxu0 0
      %646 = vmatmul.mubr.bf16.gmra.mrb[0].mxu0 %v357
      %v647 = vpop.f32.mrb[0].mxu0
      %v648 = vadd.f32 %v471, %v647
      %v649 = vpop.f32.mrb[0].mxu0
      %v650 = vpop.f32.mrb[0].mxu0
      %v651 = vadd.f32 %v474, %v650
      %v652 = vpop.f32.mrb[0].mxu0
      %653 = vmatprep.mubr.bf16.mxu0 0
      %654 = vmatmul.mubr.bf16.gmra.mrb[0].mxu0 %v360
      %v655 = vpop.f32.mrb[0].mxu0
      %v656 = vadd.f32 %v479, %v655
      %v657 = vpop.f32.mrb[0].mxu0
      %v658 = vpop.f32.mrb[0].mxu0
      %v659 = vadd.f32 %v482, %v658
      %v660 = vpop.f32.mrb[0].mxu0
      %661 = vmatprep.mubr.bf16.mxu0 0
      %662 = vmatmul.mubr.bf16.gmra.mrb[0].mxu0 %v363
      %v663 = vpop.f32.mrb[0].mxu0
      %v664 = vadd.f32 %v487, %v663
      %v665 = vpop.f32.mrb[0].mxu0
      %v666 = vpop.f32.mrb[0].mxu0
      %v667 = vadd.f32 %v490, %v666
      %v668 = vpop.f32.mrb[0].mxu0
      %669 = vmatprep.mubr.bf16.mxu0 0
      %670 = vmatmul.mubr.bf16.gmra.mrb[0].mxu0 %v366
      %v671 = vpop.f32.mrb[0].mxu0
      %v672 = vadd.f32 %v495, %v671
      %v673 = vpop.f32.mrb[0].mxu0
      %v674 = vpop.f32.mrb[0].mxu0
      %v675 = vadd.f32 %v498, %v674
      %v676 = vpop.f32.mrb[0].mxu0
      %677 = vmatprep.mubr.bf16.mxu0 0
      %678 = vmatmul.mubr.bf16.gmra.mrb[0].mxu0 %v369
      %v679 = vpop.f32.mrb[0].mxu0
      %v680 = vadd.f32 %v503, %v679
      %v681 = vpop.f32.mrb[0].mxu0
      %v682 = vpop.f32.mrb[0].mxu0
      %v683 = vadd.f32 %v506, %v682
      %v684 = vpop.f32.mrb[0].mxu0
      %685 = vmatprep.mubr.bf16.mxu0 0
      %686 = vmatmul.mubr.bf16.gmra.mrb[0].mxu0 %v372
      %v687 = vpop.f32.mrb[0].mxu0
      %v688 = vadd.f32 %v511, %v687
      %v689 = vpop.f32.mrb[0].mxu0
      %v690 = vpop.f32.mrb[0].mxu0
      %v691 = vadd.f32 %v514, %v690
      %v692 = vpop.f32.mrb[0].mxu0
      %693 = vmatprep.mubr.bf16.mxu0 0
      %694 = vmatmul.mubr.bf16.gmra.mrb[0].mxu0 %v375
      %v695 = vpop.f32.mrb[0].mxu0
      %v696 = vadd.f32 %v519, %v695
      %v697 = vpop.f32.mrb[0].mxu0
      %v698 = vpop.f32.mrb[0].mxu0
      %v699 = vadd.f32 %v522, %v698
      %v700 = vpop.f32.mrb[0].mxu0
      %701 = vmatprep.mubr.bf16.mxu0 0
      %702 = vmatmul.mubr.bf16.gmra.mrb[0].mxu0 %v378
      %v703 = vpop.f32.mrb[0].mxu0
      %v704 = vadd.f32 %v527, %v703
      %v705 = vpop.f32.mrb[0].mxu0
      %v706 = vpop.f32.mrb[0].mxu0
      %v707 = vadd.f32 %v530, %v706
      %v708 = vpop.f32.mrb[0].mxu0
      %709 = vmatprep.mubr.bf16.mxu0 0
      %710 = vmatmul.mubr.bf16.gmra.mrb[0].mxu0 %v381
      %v711 = vpop.f32.mrb[0].mxu0
      %v712 = vadd.f32 %v535, %v711
      %v713 = vpop.f32.mrb[0].mxu0
      %v714 = vpop.f32.mrb[0].mxu0
      %v715 = vadd.f32 %v538, %v714
      %v716 = vpop.f32.mrb[0].mxu0
      %717 = vmatprep.mubr.bf16.mxu0 0
      %718 = vmatmul.mubr.bf16.gmra.mrb[0].mxu0 %v384
      %v719 = vpop.f32.mrb[0].mxu0
      %v720 = vadd.f32 %v543, %v719
      %v721 = vpop.f32.mrb[0].mxu0
      %v722 = vpop.f32.mrb[0].mxu0
      %v723 = vadd.f32 %v546, %v722
      %v724 = vpop.f32.mrb[0].mxu0
      %725 = vmatprep.mubr.bf16.mxu0 0
      %726 = vmatmul.mubr.bf16.gmra.mrb[0].mxu0 %v387
      %v727 = vpop.f32.mrb[0].mxu0
      %v728 = vadd.f32 %v551, %v727
      %v729 = vpop.f32.mrb[0].mxu0
      %v730 = vpop.f32.mrb[0].mxu0
      %v731 = vadd.f32 %v554, %v730
      %v732 = vpop.f32.mrb[0].mxu0
      %733 = vdwg.mxu0
      %v734 = vld [vmem:[%s204 + $0x10] sm:$0xf]
      %v735 = vld [vmem:[%s204 + $0x14] sm:$0xf]
      %v736 = vld [vmem:[%s204 + $0x18] sm:$0xf]
      %v737 = vld [vmem:[%s204 + $0x1c] sm:$0xf]
      %v738 = vld [vmem:[%s204 + $0x20] sm:$0xf]
      %v739 = vld [vmem:[%s204 + $0x24] sm:$0xf]
      %v740 = vld [vmem:[%s204 + $0x28] sm:$0xf]
      %v741 = vld [vmem:[%s204 + $0x2c] sm:$0xf]
      %v742 = vld [vmem:[%s204 + $0x30] sm:$0xf]
      %v743 = vld [vmem:[%s204 + $0x34] sm:$0xf]
      %v744 = vld [vmem:[%s204 + $0x38] sm:$0xf]
      %v745 = vld [vmem:[%s204 + $0x3c] sm:$0xf]
      %v746 = vld [vmem:[%s204 + $0x40] sm:$0xf]
      %v747 = vld [vmem:[%s204 + $0x44] sm:$0xf]
      %v748 = vld [vmem:[%s204 + $0x48] sm:$0xf]
      %v749 = vld [vmem:[%s204 + $0x4c] sm:$0xf]
      %v750 = vld [vmem:[%s204 + $0x50] sm:$0xf]
      %v751 = vld [vmem:[%s204 + $0x54] sm:$0xf]
      %v752 = vld [vmem:[%s204 + $0x58] sm:$0xf]
      %v753 = vld [vmem:[%s204 + $0x5c] sm:$0xf]
      %v754 = vld [vmem:[%s204 + $0x60] sm:$0xf]
      %v755 = vld [vmem:[%s204 + $0x64] sm:$0xf]
      %v756 = vld [vmem:[%s204 + $0x68] sm:$0xf]
      %v757 = vld [vmem:[%s204 + $0x6c] sm:$0xf]
      %v758 = vld [vmem:[%s204 + $0x70] sm:$0xf]
      %v759 = vld [vmem:[%s204 + $0x74] sm:$0xf]
      %v760 = vld [vmem:[%s204 + $0x78] sm:$0xf]
      %v761 = vld [vmem:[%s204 + $0x7c] sm:$0xf]
      %v762 = vld [vmem:[%s204 + $0x80] sm:$0xf]
      %v763 = vld [vmem:[%s204 + $0x84] sm:$0xf]
      %v764 = vld [vmem:[%s204 + $0x88] sm:$0xf]
      %v765 = vld [vmem:[%s204 + $0x8c] sm:$0xf]
      %s766 = scalar_lea.vmem %s1, 16
      %v767 = vld [vmem:[%s766] sm:$0xf]
      %v768 = vld [vmem:[%s766 + $0x4] sm:$0x3]
      %v801 = vunpack.c.l.b16 %v734
      %v802 = vunpack.c.l.b16 %v735
      %v803 = vunpack.c.l.b16 %v736
      %v804 = vunpack.c.l.b16 %v737
      %v805 = vunpack.c.l.b16 %v738
      %v806 = vunpack.c.l.b16 %v739
      %v807 = vunpack.c.l.b16 %v740
      %v808 = vunpack.c.l.b16 %v741
      %v809 = vunpack.c.l.b16 %v742
      %v810 = vunpack.c.l.b16 %v743
      %v811 = vunpack.c.l.b16 %v744
      %v812 = vunpack.c.l.b16 %v745
      %v813 = vunpack.c.l.b16 %v746
      %v814 = vunpack.c.l.b16 %v747
      %v815 = vunpack.c.l.b16 %v748
      %v816 = vunpack.c.l.b16 %v749
      %v817 = vunpack.c.l.b16 %v750
      %v818 = vunpack.c.l.b16 %v751
      %v819 = vunpack.c.l.b16 %v752
      %v820 = vunpack.c.l.b16 %v753
      %v821 = vunpack.c.l.b16 %v754
      %v822 = vunpack.c.l.b16 %v755
      %v823 = vunpack.c.l.b16 %v756
      %v824 = vunpack.c.l.b16 %v757
      %v825 = vunpack.c.l.b16 %v758
      %v826 = vunpack.c.l.b16 %v759
      %v827 = vunpack.c.l.b16 %v760
      %v828 = vunpack.c.l.b16 %v761
      %v829 = vunpack.c.l.b16 %v762
      %v830 = vunpack.c.l.b16 %v763
      %v831 = vunpack.c.l.b16 %v764
      %v832 = vunpack.c.l.b16 %v765
      %v833 = vpack.c.b16 %v802, %v801
      %v834 = vpack.c.b16 %v804, %v803
      %v835 = vpack.c.b16 %v806, %v805
      %v836 = vpack.c.b16 %v808, %v807
      %v837 = vpack.c.b16 %v810, %v809
      %v838 = vpack.c.b16 %v812, %v811
      %v839 = vpack.c.b16 %v814, %v813
      %v840 = vpack.c.b16 %v816, %v815
      %v841 = vpack.c.b16 %v818, %v817
      %v842 = vpack.c.b16 %v820, %v819
      %v843 = vpack.c.b16 %v822, %v821
      %v844 = vpack.c.b16 %v824, %v823
      %v845 = vpack.c.b16 %v826, %v825
      %v846 = vpack.c.b16 %v828, %v827
      %v847 = vpack.c.b16 %v830, %v829
      %v848 = vpack.c.b16 %v832, %v831
      %v851 = vunpack.c.l.b16 %v767
      %v852 = vunpack.c.l.b16 %v768
      %v853 = vpack.c.b16 %v852, %v851
      %v855 = vsel %vm343, %v833, 0
      %v858 = vsel %vm343, %v834, 0
      %v861 = vsel %vm343, %v835, 0
      %v864 = vsel %vm343, %v836, 0
      %v867 = vsel %vm343, %v837, 0
      %v870 = vsel %vm343, %v838, 0
      %v873 = vsel %vm343, %v839, 0
      %v876 = vsel %vm343, %v840, 0
      %v879 = vsel %vm343, %v841, 0
      %v882 = vsel %vm343, %v842, 0
      %v885 = vsel %vm343, %v843, 0
      %v888 = vsel %vm343, %v844, 0
      %v891 = vsel %vm343, %v845, 0
      %v894 = vsel %vm343, %v846, 0
      %v897 = vsel %vm343, %v847, 0
      %v900 = vsel %vm343, %v848, 0
      %v903 = vsel %vm392, %v853, 0
      %905 = vmatprep.subr.bf16.mxu0 0
      %906 = vmatpush1.bf16.msra.mxu0 %v903
      %907 = vmatprep.subr.bf16.mxu0 0
      %908 = vmatpush1.bf16.msra.mxu0 0
      %909 = vmatprep.subr.bf16.mxu0 0
      %910 = vmatpush1.bf16.msra.mxu0 0
      %911 = vmatprep.subr.bf16.mxu0 0
      %912 = vmatpush1.bf16.msra.mxu0 0
      %913 = vmatprep.subr.bf16.mxu0 0
      %914 = vmatpush1.bf16.msra.mxu0 0
      %915 = vmatprep.subr.bf16.mxu0 0
      %916 = vmatpush1.bf16.msra.mxu0 0
      %917 = vmatprep.subr.bf16.mxu0 0
      %918 = vmatpush1.bf16.msra.mxu0 0
      %919 = vmatprep.subr.bf16.mxu0 0
      %920 = vmatpush1.bf16.msra.mxu0 0
      %921 = vmatprep.subr.bf16.mxu0 0
      %922 = vmatpush1.bf16.msra.mxu0 0
      %923 = vmatprep.subr.bf16.mxu0 0
      %924 = vmatpush1.bf16.msra.mxu0 0
      %925 = vmatprep.subr.bf16.mxu0 0
      %926 = vmatpush1.bf16.msra.mxu0 0
      %927 = vmatprep.subr.bf16.mxu0 0
      %928 = vmatpush1.bf16.msra.mxu0 0
      %929 = vmatprep.subr.bf16.mxu0 0
      %930 = vmatpush1.bf16.msra.mxu0 0
      %931 = vmatprep.subr.bf16.mxu0 0
      %932 = vmatpush1.bf16.msra.mxu0 0
      %933 = vmatprep.subr.bf16.mxu0 0
      %934 = vmatpush1.bf16.msra.mxu0 0
      %935 = vmatprep.subr.bf16.mxu0 0
      %936 = vmatpush1.bf16.msra.mxu0 0
      %937 = vmatprep.mubr.bf16.mxu0 0
      %938 = vmatmul.mubr.bf16.gmra.mrb[0].mxu0 %v855
      %v939 = vpop.f32.mrb[0].mxu0
      %v940 = vadd.f32 0.0, %v939
      %v941 = vpop.f32.mrb[0].mxu0
      %v942 = vpop.f32.mrb[0].mxu0
      %v943 = vadd.f32 0.0, %v942
      %v944 = vpop.f32.mrb[0].mxu0
      %945 = vmatprep.mubr.bf16.mxu0 0
      %946 = vmatmul.mubr.bf16.gmra.mrb[0].mxu0 %v858
      %v947 = vpop.f32.mrb[0].mxu0
      %v948 = vadd.f32 0.0, %v947
      %v949 = vpop.f32.mrb[0].mxu0
      %v950 = vpop.f32.mrb[0].mxu0
      %v951 = vadd.f32 0.0, %v950
      %v952 = vpop.f32.mrb[0].mxu0
      %953 = vmatprep.mubr.bf16.mxu0 0
      %954 = vmatmul.mubr.bf16.gmra.mrb[0].mxu0 %v861
      %v955 = vpop.f32.mrb[0].mxu0
      %v956 = vadd.f32 0.0, %v955
      %v957 = vpop.f32.mrb[0].mxu0
      %v958 = vpop.f32.mrb[0].mxu0
      %v959 = vadd.f32 0.0, %v958
      %v960 = vpop.f32.mrb[0].mxu0
      %961 = vmatprep.mubr.bf16.mxu0 0
      %962 = vmatmul.mubr.bf16.gmra.mrb[0].mxu0 %v864
      %v963 = vpop.f32.mrb[0].mxu0
      %v964 = vadd.f32 0.0, %v963
      %v965 = vpop.f32.mrb[0].mxu0
      %v966 = vpop.f32.mrb[0].mxu0
      %v967 = vadd.f32 0.0, %v966
      %v968 = vpop.f32.mrb[0].mxu0
      %969 = vmatprep.mubr.bf16.mxu0 0
      %970 = vmatmul.mubr.bf16.gmra.mrb[0].mxu0 %v867
      %v971 = vpop.f32.mrb[0].mxu0
      %v972 = vadd.f32 0.0, %v971
      %v973 = vpop.f32.mrb[0].mxu0
      %v974 = vpop.f32.mrb[0].mxu0
      %v975 = vadd.f32 0.0, %v974
      %v976 = vpop.f32.mrb[0].mxu0
      %977 = vmatprep.mubr.bf16.mxu0 0
      %978 = vmatmul.mubr.bf16.gmra.mrb[0].mxu0 %v870
      %v979 = vpop.f32.mrb[0].mxu0
      %v980 = vadd.f32 0.0, %v979
      %v981 = vpop.f32.mrb[0].mxu0
      %v982 = vpop.f32.mrb[0].mxu0
      %v983 = vadd.f32 0.0, %v982
      %v984 = vpop.f32.mrb[0].mxu0
      %985 = vmatprep.mubr.bf16.mxu0 0
      %986 = vmatmul.mubr.bf16.gmra.mrb[0].mxu0 %v873
      %v987 = vpop.f32.mrb[0].mxu0
      %v988 = vadd.f32 0.0, %v987
      %v989 = vpop.f32.mrb[0].mxu0
      %v990 = vpop.f32.mrb[0].mxu0
      %v991 = vadd.f32 0.0, %v990
      %v992 = vpop.f32.mrb[0].mxu0
      %993 = vmatprep.mubr.bf16.mxu0 0
      %994 = vmatmul.mubr.bf16.gmra.mrb[0].mxu0 %v876
      %v995 = vpop.f32.mrb[0].mxu0
      %v996 = vadd.f32 0.0, %v995
      %v997 = vpop.f32.mrb[0].mxu0
      %v998 = vpop.f32.mrb[0].mxu0
      %v999 = vadd.f32 0.0, %v998
      %v1000 = vpop.f32.mrb[0].mxu0
      %1001 = vmatprep.mubr.bf16.mxu0 0
      %1002 = vmatmul.mubr.bf16.gmra.mrb[0].mxu0 %v879
      %v1003 = vpop.f32.mrb[0].mxu0
      %v1004 = vadd.f32 0.0, %v1003
      %v1005 = vpop.f32.mrb[0].mxu0
      %v1006 = vpop.f32.mrb[0].mxu0
      %v1007 = vadd.f32 0.0, %v1006
      %v1008 = vpop.f32.mrb[0].mxu0
      %1009 = vmatprep.mubr.bf16.mxu0 0
      %1010 = vmatmul.mubr.bf16.gmra.mrb[0].mxu0 %v882
      %v1011 = vpop.f32.mrb[0].mxu0
      %v1012 = vadd.f32 0.0, %v1011
      %v1013 = vpop.f32.mrb[0].mxu0
      %v1014 = vpop.f32.mrb[0].mxu0
      %v1015 = vadd.f32 0.0, %v1014
      %v1016 = vpop.f32.mrb[0].mxu0
      %1017 = vmatprep.mubr.bf16.mxu0 0
      %1018 = vmatmul.mubr.bf16.gmra.mrb[0].mxu0 %v885
      %v1019 = vpop.f32.mrb[0].mxu0
      %v1020 = vadd.f32 0.0, %v1019
      %v1021 = vpop.f32.mrb[0].mxu0
      %v1022 = vpop.f32.mrb[0].mxu0
      %v1023 = vadd.f32 0.0, %v1022
      %v1024 = vpop.f32.mrb[0].mxu0
      %1025 = vmatprep.mubr.bf16.mxu0 0
      %1026 = vmatmul.mubr.bf16.gmra.mrb[0].mxu0 %v888
      %v1027 = vpop.f32.mrb[0].mxu0
      %v1028 = vadd.f32 0.0, %v1027
      %v1029 = vpop.f32.mrb[0].mxu0
      %v1030 = vpop.f32.mrb[0].mxu0
      %v1031 = vadd.f32 0.0, %v1030
      %v1032 = vpop.f32.mrb[0].mxu0
      %1033 = vmatprep.mubr.bf16.mxu0 0
      %1034 = vmatmul.mubr.bf16.gmra.mrb[0].mxu0 %v891
      %v1035 = vpop.f32.mrb[0].mxu0
      %v1036 = vadd.f32 0.0, %v1035
      %v1037 = vpop.f32.mrb[0].mxu0
      %v1038 = vpop.f32.mrb[0].mxu0
      %v1039 = vadd.f32 0.0, %v1038
      %v1040 = vpop.f32.mrb[0].mxu0
      %1041 = vmatprep.mubr.bf16.mxu0 0
      %1042 = vmatmul.mubr.bf16.gmra.mrb[0].mxu0 %v894
      %v1043 = vpop.f32.mrb[0].mxu0
      %v1044 = vadd.f32 0.0, %v1043
      %v1045 = vpop.f32.mrb[0].mxu0
      %v1046 = vpop.f32.mrb[0].mxu0
      %v1047 = vadd.f32 0.0, %v1046
      %v1048 = vpop.f32.mrb[0].mxu0
      %1049 = vmatprep.mubr.bf16.mxu0 0
      %1050 = vmatmul.mubr.bf16.gmra.mrb[0].mxu0 %v897
      %v1051 = vpop.f32.mrb[0].mxu0
      %v1052 = vadd.f32 0.0, %v1051
      %v1053 = vpop.f32.mrb[0].mxu0
      %v1054 = vpop.f32.mrb[0].mxu0
      %v1055 = vadd.f32 0.0, %v1054
      %v1056 = vpop.f32.mrb[0].mxu0
      %1057 = vmatprep.mubr.bf16.mxu0 0
      %1058 = vmatmul.mubr.bf16.gmra.mrb[0].mxu0 %v900
      %v1059 = vpop.f32.mrb[0].mxu0
      %v1060 = vadd.f32 0.0, %v1059
      %v1061 = vpop.f32.mrb[0].mxu0
      %v1062 = vpop.f32.mrb[0].mxu0
      %v1063 = vadd.f32 0.0, %v1062
      %v1064 = vpop.f32.mrb[0].mxu0
      %1065 = vdwg.mxu0
      %v1066 = vadd.f32 %v608, %v940
      %v1067 = vadd.f32 %v611, %v943
      %v1068 = vadd.f32 %v616, %v948
      %v1069 = vadd.f32 %v619, %v951
      %v1070 = vadd.f32 %v624, %v956
      %v1071 = vadd.f32 %v627, %v959
      %v1072 = vadd.f32 %v632, %v964
      %v1073 = vadd.f32 %v635, %v967
      %v1074 = vadd.f32 %v640, %v972
      %v1075 = vadd.f32 %v643, %v975
      %v1076 = vadd.f32 %v648, %v980
      %v1077 = vadd.f32 %v651, %v983
      %v1078 = vadd.f32 %v656, %v988
      %v1079 = vadd.f32 %v659, %v991
      %v1080 = vadd.f32 %v664, %v996
      %v1081 = vadd.f32 %v667, %v999
      %v1082 = vadd.f32 %v672, %v1004
      %v1083 = vadd.f32 %v675, %v1007
      %v1084 = vadd.f32 %v680, %v1012
      %v1085 = vadd.f32 %v683, %v1015
      %v1086 = vadd.f32 %v688, %v1020
      %v1087 = vadd.f32 %v691, %v1023
      %v1088 = vadd.f32 %v696, %v1028
      %v1089 = vadd.f32 %v699, %v1031
      %v1090 = vadd.f32 %v704, %v1036
      %v1091 = vadd.f32 %v707, %v1039
      %v1092 = vadd.f32 %v712, %v1044
      %v1093 = vadd.f32 %v715, %v1047
      %v1094 = vadd.f32 %v720, %v1052
      %v1095 = vadd.f32 %v723, %v1055
      %v1096 = vadd.f32 %v728, %v1060
      %v1097 = vadd.f32 %v731, %v1063
      // Predicated region
      $region41: #{conv_block.1} parent=35 // pred_check
        %p1098 = pneg %p211
      $region42: #{conv_block.1} parent=35 // pred_check_branch
        %1100 = sbr.rel (%p1098) target = $region44
      $region43: #{conv_block.1} parent=35 // pred_region
        %v1101 = vld [vmem:[#allocation2] sm:$0x1]
        %v1102 = vadd.f32 %v1066, %v1067
        %v1103 = vadd.f32 %v1102, %v1068
        %v1104 = vadd.f32 %v1103, %v1069
        %v1105 = vadd.f32 %v1104, %v1070
        %v1106 = vadd.f32 %v1105, %v1071
        %v1107 = vadd.f32 %v1106, %v1072
        %v1108 = vadd.f32 %v1107, %v1073
        %v1109 = vadd.f32 %v1108, %v1074
        %v1110 = vadd.f32 %v1109, %v1075
        %v1111 = vadd.f32 %v1110, %v1076
        %v1112 = vadd.f32 %v1111, %v1077
        %v1113 = vadd.f32 %v1112, %v1078
        %v1114 = vadd.f32 %v1113, %v1079
        %v1115 = vadd.f32 %v1114, %v1080
        %v1116 = vadd.f32 %v1115, %v1081
        %v1117 = vadd.f32 %v1116, %v1082
        %v1118 = vadd.f32 %v1117, %v1083
        %v1119 = vadd.f32 %v1118, %v1084
        %v1120 = vadd.f32 %v1119, %v1085
        %v1121 = vadd.f32 %v1120, %v1086
        %v1122 = vadd.f32 %v1121, %v1087
        %v1123 = vadd.f32 %v1122, %v1088
        %v1124 = vadd.f32 %v1123, %v1089
        %v1125 = vadd.f32 %v1124, %v1090
        %v1126 = vadd.f32 %v1125, %v1091
        %v1127 = vadd.f32 %v1126, %v1092
        %v1128 = vadd.f32 %v1127, %v1093
        %v1129 = vadd.f32 %v1128, %v1094
        %v1130 = vadd.f32 %v1129, %v1095
        %v1131 = vadd.f32 %v1130, %v1096
        %v1132 = vadd.f32 %v1131, %v1097
        %v1133 = vrot.slane %v1132, 4
        %v1134 = vadd.f32 %v1132, %v1133
        %v1135 = vrot.slane %v1134, 2
        %v1136 = vadd.f32 %v1134, %v1135
        %v1137 = vrot.slane %v1136, 1
        %v1138 = vadd.f32 %v1136, %v1137
        %v1139 = vadd.f32 %v1101, %v1138
        %1140 = vst [vmem:[#allocation2] sm:$0x1] %v1139
        %v1141 = vld [vmem:[#allocation3] sm:$0x1]
        %v1142 = vmul.f32 %v1066, %v1066
        %v1143 = vmul.f32 %v1067, %v1067
        %v1144 = vmul.f32 %v1068, %v1068
        %v1145 = vmul.f32 %v1069, %v1069
        %v1146 = vmul.f32 %v1070, %v1070
        %v1147 = vmul.f32 %v1071, %v1071
        %v1148 = vmul.f32 %v1072, %v1072
        %v1149 = vmul.f32 %v1073, %v1073
        %v1150 = vmul.f32 %v1074, %v1074
        %v1151 = vmul.f32 %v1075, %v1075
        %v1152 = vmul.f32 %v1076, %v1076
        %v1153 = vmul.f32 %v1077, %v1077
        %v1154 = vmul.f32 %v1078, %v1078
        %v1155 = vmul.f32 %v1079, %v1079
        %v1156 = vmul.f32 %v1080, %v1080
        %v1157 = vmul.f32 %v1081, %v1081
        %v1158 = vmul.f32 %v1082, %v1082
        %v1159 = vmul.f32 %v1083, %v1083
        %v1160 = vmul.f32 %v1084, %v1084
        %v1161 = vmul.f32 %v1085, %v1085
        %v1162 = vmul.f32 %v1086, %v1086
        %v1163 = vmul.f32 %v1087, %v1087
        %v1164 = vmul.f32 %v1088, %v1088
        %v1165 = vmul.f32 %v1089, %v1089
        %v1166 = vmul.f32 %v1090, %v1090
        %v1167 = vmul.f32 %v1091, %v1091
        %v1168 = vmul.f32 %v1092, %v1092
        %v1169 = vmul.f32 %v1093, %v1093
        %v1170 = vmul.f32 %v1094, %v1094
        %v1171 = vmul.f32 %v1095, %v1095
        %v1172 = vmul.f32 %v1096, %v1096
        %v1173 = vmul.f32 %v1097, %v1097
        %v1174 = vadd.f32 %v1142, %v1143
        %v1175 = vadd.f32 %v1174, %v1144
        %v1176 = vadd.f32 %v1175, %v1145
        %v1177 = vadd.f32 %v1176, %v1146
        %v1178 = vadd.f32 %v1177, %v1147
        %v1179 = vadd.f32 %v1178, %v1148
        %v1180 = vadd.f32 %v1179, %v1149
        %v1181 = vadd.f32 %v1180, %v1150
        %v1182 = vadd.f32 %v1181, %v1151
        %v1183 = vadd.f32 %v1182, %v1152
        %v1184 = vadd.f32 %v1183, %v1153
        %v1185 = vadd.f32 %v1184, %v1154
        %v1186 = vadd.f32 %v1185, %v1155
        %v1187 = vadd.f32 %v1186, %v1156
        %v1188 = vadd.f32 %v1187, %v1157
        %v1189 = vadd.f32 %v1188, %v1158
        %v1190 = vadd.f32 %v1189, %v1159
        %v1191 = vadd.f32 %v1190, %v1160
        %v1192 = vadd.f32 %v1191, %v1161
        %v1193 = vadd.f32 %v1192, %v1162
        %v1194 = vadd.f32 %v1193, %v1163
        %v1195 = vadd.f32 %v1194, %v1164
        %v1196 = vadd.f32 %v1195, %v1165
        %v1197 = vadd.f32 %v1196, %v1166
        %v1198 = vadd.f32 %v1197, %v1167
        %v1199 = vadd.f32 %v1198, %v1168
        %v1200 = vadd.f32 %v1199, %v1169
        %v1201 = vadd.f32 %v1200, %v1170
        %v1202 = vadd.f32 %v1201, %v1171
        %v1203 = vadd.f32 %v1202, %v1172
        %v1204 = vadd.f32 %v1203, %v1173
        %v1205 = vrot.slane %v1204, 4
        %v1206 = vadd.f32 %v1204, %v1205
        %v1207 = vrot.slane %v1206, 2
        %v1208 = vadd.f32 %v1206, %v1207
        %v1209 = vrot.slane %v1208, 1
        %v1210 = vadd.f32 %v1208, %v1209
        %v1211 = vadd.f32 %v1141, %v1210
        %1212 = vst [vmem:[#allocation3] sm:$0x1] %v1211
      $region44: #{conv_block.1} parent=35 // pred_fallthru
        _
      %p1213 = scmp.eq.s32.totalorder %s19, 1
      // Predicated region
      $region45: #{conv_block.1} parent=35 // pred_check
        %p1214 = pneg %p1213
      $region46: #{conv_block.1} parent=35 // pred_check_branch
        %1216 = sbr.rel (%p1214) target = $region48
      $region47: #{conv_block.1} parent=35 // pred_region
        %v1217 = vld [vmem:[#allocation2] sm:$0x1]
        %v1218 = vmul.f32 %v1217, 0.001953125
        %v1219 = vld [vmem:[#allocation3] sm:$0x1]
        %v1220 = vmul.f32 %v1219, 0.001953125
        %v1221 = vmul.f32 %v1218, %v1218
        %v1222 = vsub.f32 %v1220, %v1221
        %v1223 = vmax.f32 %v1222, 0.0
        %v1224 = vld [vmem:[%s2] sm:$0x1]
        %v1225 = vadd.f32 %v1223, 1e-05
        %v1226 = vrsqrt.pop %v1225
        %v1227 = vmul.f32 %v1224, %v1226
        %v1228 = vld [vmem:[%s3] sm:$0x1]
        %v1229 = vmul.f32 %v1218, %v1227
        %v1230 = vsub.f32 %v1228, %v1229
        %v1232 = vlaneseq
        %v1233 = vshrl.u32 %v1232, 7
        %v1234 = vsub.s32 0, %v1233
        %v1235 = vrot.slane %v1227, %v1234
        %v1237 = vmul.f32 %v1066, %v1235
        %v1238 = vmul.f32 %v1067, %v1235
        %v1239 = vmul.f32 %v1068, %v1235
        %v1240 = vmul.f32 %v1069, %v1235
        %v1241 = vmul.f32 %v1070, %v1235
        %v1242 = vmul.f32 %v1071, %v1235
        %v1243 = vmul.f32 %v1072, %v1235
        %v1244 = vmul.f32 %v1073, %v1235
        %v1245 = vmul.f32 %v1074, %v1235
        %v1246 = vmul.f32 %v1075, %v1235
        %v1247 = vmul.f32 %v1076, %v1235
        %v1248 = vmul.f32 %v1077, %v1235
        %v1249 = vmul.f32 %v1078, %v1235
        %v1250 = vmul.f32 %v1079, %v1235
        %v1251 = vmul.f32 %v1080, %v1235
        %v1252 = vmul.f32 %v1081, %v1235
        %v1253 = vmul.f32 %v1082, %v1235
        %v1254 = vmul.f32 %v1083, %v1235
        %v1255 = vmul.f32 %v1084, %v1235
        %v1256 = vmul.f32 %v1085, %v1235
        %v1257 = vmul.f32 %v1086, %v1235
        %v1258 = vmul.f32 %v1087, %v1235
        %v1259 = vmul.f32 %v1088, %v1235
        %v1260 = vmul.f32 %v1089, %v1235
        %v1261 = vmul.f32 %v1090, %v1235
        %v1262 = vmul.f32 %v1091, %v1235
        %v1263 = vmul.f32 %v1092, %v1235
        %v1264 = vmul.f32 %v1093, %v1235
        %v1265 = vmul.f32 %v1094, %v1235
        %v1266 = vmul.f32 %v1095, %v1235
        %v1267 = vmul.f32 %v1096, %v1235
        %v1268 = vmul.f32 %v1097, %v1235
        %v1270 = vlaneseq
        %v1271 = vshrl.u32 %v1270, 7
        %v1272 = vsub.s32 0, %v1271
        %v1273 = vrot.slane %v1230, %v1272
        %v1275 = vadd.f32 %v1237, %v1273
        %v1276 = vadd.f32 %v1238, %v1273
        %v1277 = vadd.f32 %v1239, %v1273
        %v1278 = vadd.f32 %v1240, %v1273
        %v1279 = vadd.f32 %v1241, %v1273
        %v1280 = vadd.f32 %v1242, %v1273
        %v1281 = vadd.f32 %v1243, %v1273
        %v1282 = vadd.f32 %v1244, %v1273
        %v1283 = vadd.f32 %v1245, %v1273
        %v1284 = vadd.f32 %v1246, %v1273
        %v1285 = vadd.f32 %v1247, %v1273
        %v1286 = vadd.f32 %v1248, %v1273
        %v1287 = vadd.f32 %v1249, %v1273
        %v1288 = vadd.f32 %v1250, %v1273
        %v1289 = vadd.f32 %v1251, %v1273
        %v1290 = vadd.f32 %v1252, %v1273
        %v1291 = vadd.f32 %v1253, %v1273
        %v1292 = vadd.f32 %v1254, %v1273
        %v1293 = vadd.f32 %v1255, %v1273
        %v1294 = vadd.f32 %v1256, %v1273
        %v1295 = vadd.f32 %v1257, %v1273
        %v1296 = vadd.f32 %v1258, %v1273
        %v1297 = vadd.f32 %v1259, %v1273
        %v1298 = vadd.f32 %v1260, %v1273
        %v1299 = vadd.f32 %v1261, %v1273
        %v1300 = vadd.f32 %v1262, %v1273
        %v1301 = vadd.f32 %v1263, %v1273
        %v1302 = vadd.f32 %v1264, %v1273
        %v1303 = vadd.f32 %v1265, %v1273
        %v1304 = vadd.f32 %v1266, %v1273
        %v1305 = vadd.f32 %v1267, %v1273
        %v1306 = vadd.f32 %v1268, %v1273
        %v1307 = vmax.f32 %v1275, 0.0
        %v1308 = vmax.f32 %v1276, 0.0
        %v1309 = vmax.f32 %v1277, 0.0
        %v1310 = vmax.f32 %v1278, 0.0
        %v1311 = vmax.f32 %v1279, 0.0
        %v1312 = vmax.f32 %v1280, 0.0
        %v1313 = vmax.f32 %v1281, 0.0
        %v1314 = vmax.f32 %v1282, 0.0
        %v1315 = vmax.f32 %v1283, 0.0
        %v1316 = vmax.f32 %v1284, 0.0
        %v1317 = vmax.f32 %v1285, 0.0
        %v1318 = vmax.f32 %v1286, 0.0
        %v1319 = vmax.f32 %v1287, 0.0
        %v1320 = vmax.f32 %v1288, 0.0
        %v1321 = vmax.f32 %v1289, 0.0
        %v1322 = vmax.f32 %v1290, 0.0
        %v1323 = vmax.f32 %v1291, 0.0
        %v1324 = vmax.f32 %v1292, 0.0
        %v1325 = vmax.f32 %v1293, 0.0
        %v1326 = vmax.f32 %v1294, 0.0
        %v1327 = vmax.f32 %v1295, 0.0
        %v1328 = vmax.f32 %v1296, 0.0
        %v1329 = vmax.f32 %v1297, 0.0
        %v1330 = vmax.f32 %v1298, 0.0
        %v1331 = vmax.f32 %v1299, 0.0
        %v1332 = vmax.f32 %v1300, 0.0
        %v1333 = vmax.f32 %v1301, 0.0
        %v1334 = vmax.f32 %v1302, 0.0
        %v1335 = vmax.f32 %v1303, 0.0
        %v1336 = vmax.f32 %v1304, 0.0
        %v1337 = vmax.f32 %v1305, 0.0
        %v1338 = vmax.f32 %v1306, 0.0
        %1339 = vxpose.xlu0.b32.start [1/16] %v1307, 128
        %1340 = vxpose.xlu0.b32.cont [2/16] %v1308, 128
        %1341 = vxpose.xlu0.b32.cont [3/16] %v1309, 128
        %1342 = vxpose.xlu0.b32.cont [4/16] %v1310, 128
        %1343 = vxpose.xlu0.b32.cont [5/16] %v1311, 128
        %1344 = vxpose.xlu0.b32.cont [6/16] %v1312, 128
        %1345 = vxpose.xlu0.b32.cont [7/16] %v1313, 128
        %1346 = vxpose.xlu0.b32.cont [8/16] %v1314, 128
        %1347 = vxpose.xlu0.b32.cont [9/16] %v1315, 128
        %1348 = vxpose.xlu0.b32.cont [10/16] %v1316, 128
        %1349 = vxpose.xlu0.b32.cont [11/16] %v1317, 128
        %1350 = vxpose.xlu0.b32.cont [12/16] %v1318, 128
        %1351 = vxpose.xlu0.b32.cont [13/16] %v1319, 128
        %1352 = vxpose.xlu0.b32.cont [14/16] %v1320, 128
        %1353 = vxpose.xlu0.b32.cont [15/16] %v1321, 128
        %1354 = vxpose.xlu0.b32.end [16/16] %v1322, 128
        %v1355 = vpop.trf.xlu0
        %v1356 = vpop.trf.xlu0
        %v1357 = vpop.trf.xlu0
        %v1358 = vpop.trf.xlu0
        %v1359 = vpop.trf.xlu0
        %v1360 = vpop.trf.xlu0
        %v1361 = vpop.trf.xlu0
        %v1362 = vpop.trf.xlu0
        %v1363 = vpop.trf.xlu0
        %v1364 = vpop.trf.xlu0
        %v1365 = vpop.trf.xlu0
        %v1366 = vpop.trf.xlu0
        %v1367 = vpop.trf.xlu0
        %v1368 = vpop.trf.xlu0
        %v1369 = vpop.trf.xlu0
        %v1370 = vpop.trf.xlu0
        %1371 = vxpose.xlu0.b32.start [1/16] %v1323, 128
        %1372 = vxpose.xlu0.b32.cont [2/16] %v1324, 128
        %1373 = vxpose.xlu0.b32.cont [3/16] %v1325, 128
        %1374 = vxpose.xlu0.b32.cont [4/16] %v1326, 128
        %1375 = vxpose.xlu0.b32.cont [5/16] %v1327, 128
        %1376 = vxpose.xlu0.b32.cont [6/16] %v1328, 128
        %1377 = vxpose.xlu0.b32.cont [7/16] %v1329, 128
        %1378 = vxpose.xlu0.b32.cont [8/16] %v1330, 128
        %1379 = vxpose.xlu0.b32.cont [9/16] %v1331, 128
        %1380 = vxpose.xlu0.b32.cont [10/16] %v1332, 128
        %1381 = vxpose.xlu0.b32.cont [11/16] %v1333, 128
        %1382 = vxpose.xlu0.b32.cont [12/16] %v1334, 128
        %1383 = vxpose.xlu0.b32.cont [13/16] %v1335, 128
        %1384 = vxpose.xlu0.b32.cont [14/16] %v1336, 128
        %1385 = vxpose.xlu0.b32.cont [15/16] %v1337, 128
        %1386 = vxpose.xlu0.b32.end [16/16] %v1338, 128
        %v1387 = vpop.trf.xlu0
        %v1388 = vpop.trf.xlu0
        %v1389 = vpop.trf.xlu0
        %v1390 = vpop.trf.xlu0
        %v1391 = vpop.trf.xlu0
        %v1392 = vpop.trf.xlu0
        %v1393 = vpop.trf.xlu0
        %v1394 = vpop.trf.xlu0
        %v1395 = vpop.trf.xlu0
        %v1396 = vpop.trf.xlu0
        %v1397 = vpop.trf.xlu0
        %v1398 = vpop.trf.xlu0
        %v1399 = vpop.trf.xlu0
        %v1400 = vpop.trf.xlu0
        %v1401 = vpop.trf.xlu0
        %v1402 = vpop.trf.xlu0
        %1403 = vst [vmem:[%s209] sm:$0xff] %v1355
        %1404 = vst [vmem:[%s209 + $0x8] sm:$0xff] %v1387
      $region48: #{conv_block.1} parent=35 // pred_fallthru
        _
      %p1405 = scmp.lt.s32.totalorder %s20, 1
      %s1406 = scalar_select %p1405, %s20, 1
      %s1407 = smul.addr %s1406, 2
      %s1408 = smul.addr %s1407, 8
      %s1409 = scalar_lea.vmem %s4, %s1408
      // Predicated region
      $region49: #{conv_block.1} parent=35 // pred_check
        %p1410 = pneg %p134
      $region50: #{conv_block.1} parent=35 // pred_check_branch
        %1412 = sbr.rel (%p1410) target = $region52
      $region51: #{conv_block.1} parent=35 // pred_region
        _
      $region52: #{conv_block.1} parent=35 // pred_fallthru
        _
    $region36: #{conv_block.1} parent=5 // pred_fallthru
      _
    %p1413 = scmp.le.s32.totalorder 2, %s10
    // Predicated region
    $region53: #{conv_block.1} parent=5 // pred_check
      %p1414 = pneg %p1413
    $region54: #{conv_block.1} parent=5 // pred_check_branch
      %1416 = sbr.rel (%p1414) target = $region56
    $region55: #{conv_block.1} parent=5 // pred_region
      %s1417 = ssub.s32 %s10, 2
      // Predicated region
      $region57: #{conv_block.1} parent=55 // pred_check
        %p1418 = pneg %p140
      $region58: #{conv_block.1} parent=55 // pred_check_branch
        %1420 = sbr.rel (%p1418) target = $region60
      $region59: #{conv_block.1} parent=55 // pred_region
        %p1421 = scmp.lt.s32.totalorder %s22, 1
        %s1422 = scalar_select %p1421, %s22, 1
        %s1423 = smul.addr %s1422, 2
        %s1424 = smul.addr %s1423, 8
        %s1425 = scalar_lea.vmem %s4, %s1424
      $region60: #{conv_block.1} parent=55 // pred_fallthru
        _
    $region56: #{conv_block.1} parent=5 // pred_fallthru
      _
  $region6: #{conv_block.1} parent=0 // loop_footer
    %s14 = sadd.s32 1, %s10
  $region7: #{conv_block.1} parent=0 // loop_footer_branch
    %9 = sbr.rel target = $region3
  $region8: #{conv_block.1} parent=0 // loop_exit
    _

</llo_original>
